<compile_context>
chip_gen: v5e
topology: v5e:2x2
jax: 0.10.0
libtpu: 0.0.40
codegen_flags: <defaults>
</compile_context>

<pallas_src>
import jax
import jax.numpy as jnp
from jax import lax
from jax.experimental import pallas as pl
from jax.experimental.pallas import tpu as pltpu

_MIB = 1024 * 1024
_GATHER_CHUNK = 8            # rows per dense store in the chunked resident path
_ONEHOT_MAX_BYTES = 4 * _MIB  # max size of the (TQ, V) one-hot intermediate
_HBM_INFLIGHT = 8            # in-flight row DMAs in the HBM fallback


def _pick_tq(T: int, B: int) -> int:
    """Token-tile size: largest multiple of 8 dividing T; whole T if ragged."""
    cands = [c for c in (1024, 512, 256, 128, 64, 32, 16, 8) if T % c == 0]
    if B == 1:
        # v7x megacore: make sure the parallel grid has >= 2 steps when possible.
        for c in cands:
            if T // c >= 2:
                return c
    if cands:
        return cands[0]
    # Ragged T (e.g. CLIP's 77): whole sequence per grid step.
    # TODO(synk): for B == 1 and ragged T, split the embedding dim over a second
    # parallel grid axis so both v7x TensorCores get work.
    return T


def _vmem_budget() -> int:
    """Generation-aware scoped-VMEM budget (bytes)."""
    try:
        cap = int(pltpu.get_tpu_info().vmem_capacity_bytes)
    except Exception:
        cap = 64 * _MIB  # conservative default (v7x per-TensorCore VMEM)
    return max(min(cap - 8 * _MIB, 100 * _MIB), 16 * _MIB)


def _table_spec(V, E, index_map, single_buffer):
    """BlockSpec for the VMEM-resident vocab table (constant block index)."""
    if single_buffer:
        # Constant block index -> double buffering only doubles VMEM footprint.
        return pl.BlockSpec((V, E), index_map, pipeline_mode=pl.Buffered(1))
    return pl.BlockSpec((V, E), index_map)


# ---------------------------------------------------------------------------
# Resident paths: the vocab table lives in VMEM for the whole kernel.
# ---------------------------------------------------------------------------
def _clip_embedding_resident(tokens, token_embedding, position_embedding, *,
                             use_onehot, vmem_limit):
    B, T = tokens.shape
    V, E = token_embedding.shape
    TQ = _pick_tq(T, B)
    n_t = T // TQ
    out_dtype = token_embedding.dtype
    cparams = pltpu.CompilerParams(
        dimension_semantics=("parallel", "parallel"),
        vmem_limit_bytes=int(vmem_limit))

    if use_onehot:
        # ---- path A: one-hot MXU gather, one dense (TQ, E) store ------------
        tok2d = tokens.reshape(B * n_t, TQ).astype(jnp.int32)

        def kernel(tok_ref, emb_ref, pos_ref, out_ref):
            tt = pl.program_id(0)
            b = pl.program_id(1)
            ids = tok_ref[b * n_t + tt, :]                         # (TQ,) int32
            onehot = (ids[:, None] ==
                      lax.broadcasted_iota(jnp.int32, (TQ, V), 1)
                      ).astype(emb_ref.dtype)                      # (TQ, V)
            gathered = jnp.dot(onehot, emb_ref[...],
                               preferred_element_type=jnp.float32)  # MXU
            out_ref[...] = (gathered +
                            pos_ref[...].astype(jnp.float32)).astype(out_ref.dtype)

        def build_and_call(single_buffer):
            return pl.pallas_call(
                kernel,
                out_shape=jax.ShapeDtypeStruct((B, T, E), out_dtype),
                grid_spec=pltpu.PrefetchScalarGridSpec(
                    num_scalar_prefetch=0,
                    grid=(n_t, B),                 # token-tile outer, batch inner
                    in_specs=[
                        pl.BlockSpec((B * n_t, TQ), lambda tt, b: (0, 0)),
                        _table_spec(V, E, lambda tt, b: (0, 0), single_buffer),
                        pl.BlockSpec((TQ, E), lambda tt, b: (tt, 0)),
                    ],
                    out_specs=pl.BlockSpec((None, TQ, E),
                                           lambda tt, b: (b, tt, 0)),
                ),
                compiler_params=cparams,
            )(tok2d, token_embedding, position_embedding)

    else:
        # ---- path B: chunked dynamic-slice gather, dense (8, E) stores ------
        tok_flat = tokens.reshape(B * T).astype(jnp.int32)
        CH = _GATHER_CHUNK
        n_chunks = TQ // CH

        def kernel(tok_ref, emb_ref, pos_ref, out_ref):
            tt = pl.program_id(0)
            b = pl.program_id(1)
            base = b * T + tt * TQ

            def chunk(c, carry):
                t0 = pl.multiple_of(c * CH, CH)
                rows = []
                for j in range(CH):                     # 8-wide unrolled gather
                    tid = jnp.clip(tok_ref[base + t0 + j], 0, V - 1)
                    rows.append(emb_ref[pl.ds(tid, 1), :])
                blk = jnp.concatenate(rows, axis=0).astype(jnp.float32)  # (8, E)
                pos = pos_ref[pl.ds(t0, CH), :].astype(jnp.float32)
                out_ref[pl.ds(t0, CH), :] = (blk + pos).astype(out_ref.dtype)
                return carry

            if n_chunks > 0:
                lax.fori_loop(0, n_chunks, chunk, 0)
            for t in range(n_chunks * CH, TQ):          # static ragged tail
                tid = jnp.clip(tok_ref[base + t], 0, V - 1)
                out_ref[pl.ds(t, 1), :] = (
                    emb_ref[pl.ds(tid, 1), :].astype(jnp.float32)
                    + pos_ref[pl.ds(t, 1), :].astype(jnp.float32)
                ).astype(out_ref.dtype)

        def build_and_call(single_buffer):
            return pl.pallas_call(
                kernel,
                out_shape=jax.ShapeDtypeStruct((B, T, E), out_dtype),
                grid_spec=pltpu.PrefetchScalarGridSpec(
                    num_scalar_prefetch=1,             # flat token ids -> SMEM
                    grid=(n_t, B),
                    in_specs=[
                        _table_spec(V, E, lambda tt, b, toks: (0, 0), single_buffer),
                        pl.BlockSpec((TQ, E), lambda tt, b, toks: (tt, 0)),
                    ],
                    out_specs=pl.BlockSpec((None, TQ, E),
                                           lambda tt, b, toks: (b, tt, 0)),
                ),
                compiler_params=cparams,
            )(tok_flat, token_embedding, position_embedding)

    try:
        return build_and_call(True)      # single-buffered resident table
    except Exception:
        return build_and_call(False)     # fall back to default double buffering


# ---------------------------------------------------------------------------
# Fallback: vocab table too large for VMEM -> batched row-DMA gather from HBM.
# ---------------------------------------------------------------------------
def _clip_embedding_hbm_gather(tokens, token_embedding, position_embedding, *,
                               vmem_limit):
    B, T = tokens.shape
    V, E = token_embedding.shape
    TQ = _pick_tq(T, B)
    n_t = T // TQ
    out_dtype = token_embedding.dtype
    NINF = min(_HBM_INFLIGHT, TQ)
    tok_flat = tokens.reshape(B * T).astype(jnp.int32)

    def kernel(tok_ref, emb_hbm, pos_ref, out_ref, gath, sem):
        tt = pl.program_id(0)
        b = pl.program_id(1)
        base = b * T + tt * TQ

        def start(t):
            tid = jnp.clip(tok_ref[base + t], 0, V - 1)
            pltpu.make_async_copy(
                emb_hbm.at[pl.ds(tid, 1), :],
                gath.at[pl.ds(t, 1), :],
                sem.at[t % NINF],
            ).start()

        for t in range(NINF):            # prime NINF in-flight row DMAs
            start(t)

        def body(t, carry):
            pltpu.make_async_copy(
                emb_hbm.at[pl.ds(0, 1), :],        # shape descriptor for wait
                gath.at[pl.ds(t, 1), :],
                sem.at[t % NINF],
            ).wait()

            @pl.when(t + NINF < TQ)
            def _():
                start(t + NINF)
            return carry

        lax.fori_loop(0, TQ, body, 0)
        # One dense (TQ, E) f32 add + store for the whole tile.
        out_ref[...] = (gath[...].astype(jnp.float32)
                        + pos_ref[...].astype(jnp.float32)).astype(out_ref.dtype)

    return pl.pallas_call(
        kernel,
        out_shape=jax.ShapeDtypeStruct((B, T, E), out_dtype),
        grid_spec=pltpu.PrefetchScalarGridSpec(
            num_scalar_prefetch=1,                     # flat token ids -> SMEM
            grid=(n_t, B),
            in_specs=[
                pl.BlockSpec(memory_space=pl.ANY),     # table stays in HBM
                pl.BlockSpec((TQ, E), lambda tt, b, toks: (tt, 0)),
            ],
            out_specs=pl.BlockSpec((None, TQ, E), lambda tt, b, toks: (b, tt, 0)),
            scratch_shapes=[
                pltpu.VMEM((TQ, E), token_embedding.dtype),
                pltpu.SemaphoreType.DMA((NINF,)),
            ],
        ),
        compiler_params=pltpu.CompilerParams(
            dimension_semantics=("parallel", "parallel"),
            vmem_limit_bytes=int(vmem_limit)),
    )(tok_flat, token_embedding, position_embedding)


# ---------------------------------------------------------------------------
# Public entry point.
# ---------------------------------------------------------------------------
def clip_embedding(tokens, token_embedding, position_embedding):
    """tokens: (B, T) int; token_embedding: (V, E); position_embedding: (T, E)."""
    B, T = tokens.shape
    V, E = token_embedding.shape
    TQ = _pick_tq(T, B)
    vmem_limit = _vmem_budget()

    emb_bytes = V * E * jnp.dtype(token_embedding.dtype).itemsize   # single copy
    out_blk = 2 * TQ * E * jnp.dtype(token_embedding.dtype).itemsize
    pos_blk = 2 * TQ * E * jnp.dtype(position_embedding.dtype).itemsize
    use_onehot = TQ * V * 4 <= _ONEHOT_MAX_BYTES
    scratch = TQ * V * 8 if use_onehot else _GATHER_CHUNK * E * 8
    need = emb_bytes + out_blk + pos_blk + scratch + B * T * 8 + 2 * _MIB

    if need <= vmem_limit - 4 * _MIB:
        try:
            return _clip_embedding_resident(
                tokens, token_embedding, position_embedding,
                use_onehot=use_onehot, vmem_limit=vmem_limit)
        except Exception:
            pass  # last-resort safety net: fall through to the HBM gather
    return _clip_embedding_hbm_gather(
        tokens, token_embedding, position_embedding, vmem_limit=vmem_limit)


if __name__ == "__main__":
    # Small shapes consistent with the module's forward.
    n_vocab, n_embd, n_tokens, batch = 64, 128, 8, 2

    key = jax.random.PRNGKey(0)
    k_tok_emb, k_pos_emb, k_tokens = jax.random.split(key, 3)
    # nn.Embedding default init ~ N(0,1); position_embedding = torch.randn -> N(0,1)
    token_embedding = jax.random.normal(k_tok_emb, (n_vocab, n_embd), jnp.float32)
    position_embedding = jax.random.normal(k_pos_emb, (n_tokens, n_embd), jnp.float32)
    tokens = jax.random.randint(k_tokens, (batch, n_tokens), 0, n_vocab, jnp.int32)

    ref = jnp.take(token_embedding, tokens, axis=0) + position_embedding[None]
    vmem_limit = _vmem_budget()

    # 1) Default routing (resident one-hot MXU gather at these shapes).
    out = jax.block_until_ready(
        clip_embedding(tokens, token_embedding, position_embedding))
    assert out.shape == (batch, n_tokens, n_embd)
    assert out.dtype == jnp.float32
    assert jnp.allclose(out, ref, atol=1e-5), "one-hot resident path mismatch"

    # 2) Chunked resident gather (used for large-vocab resident tables).
    out2 = jax.block_until_ready(
        _clip_embedding_resident(tokens, token_embedding, position_embedding,
                                 use_onehot=False, vmem_limit=vmem_limit))
    assert jnp.allclose(out2, ref, atol=1e-5), "chunked resident path mismatch"

    # 3) HBM row-DMA gather fallback (used when the table exceeds VMEM).
    out3 = jax.block_until_ready(
        _clip_embedding_hbm_gather(tokens, token_embedding, position_embedding,
                                   vmem_limit=vmem_limit))
    assert jnp.allclose(out3, ref, atol=1e-5), "HBM gather path mismatch"

    print("KERNEL_OK")
</pallas_src>

<mosaic_0001>
module attributes {stable_mosaic.version = 11 : i64} {
  func.func @kernel(%arg0: i32, %arg1: i32, %arg2: memref<2x8xi32, #tpu.memory_space<vmem>>, %arg3: memref<64x128xf32, #tpu.memory_space<vmem>>, %arg4: memref<8x128xf32, #tpu.memory_space<vmem>>, %arg5: memref<1x8x128xf32, #tpu.memory_space<vmem>>) attributes {dimension_semantics = [#tpu.dimension_semantics<parallel>, #tpu.dimension_semantics<parallel>], iteration_bounds = array<i64: 1, 2>, scalar_prefetch = 0 : i64, scratch_operands = 0 : i64, tpu.core_type = #tpu.core_type<tc>, window_params = [{pipeline_mode = #tpu.pipeline_mode<synchronous>, transform_indices = @transform_0, window_bounds = array<i64: 2, 8>}, {pipeline_mode = #tpu.pipeline_mode<synchronous>, transform_indices = @transform_1, window_bounds = array<i64: 64, 128>}, {transform_indices = @transform_2, window_bounds = array<i64: 8, 128>}, {transform_indices = @transform_3, window_bounds = array<i64: 1, 8, 128>}]} {
    %c1_i32 = arith.constant 1 : i32
    %0 = arith.muli %arg1, %c1_i32 : i32
    %1 = arith.addi %0, %arg0 : i32
    %2 = arith.index_cast %1 : i32 to index
    %c0 = arith.constant 0 : index
    %3 = vector.load %arg2[%2, %c0] : memref<2x8xi32, #tpu.memory_space<vmem>>, vector<1x8xi32>
    %4 = vector.shape_cast %3 : vector<1x8xi32> to vector<8xi32>
    %5 = vector.shape_cast %4 : vector<8xi32> to vector<8x1xi32>
    %6 = tpu.iota {dimensions = array<i32: 1>} : vector<8x64xi32>
    %7 = vector.broadcast %5 : vector<8x1xi32> to vector<8x64xi32>
    %8 = arith.cmpi eq, %7, %6 : vector<8x64xi32>
    %9 = arith.extui %8 : vector<8x64xi1> to vector<8x64xi32>
    %10 = arith.sitofp %9 : vector<8x64xi32> to vector<8x64xf32>
    %c0_0 = arith.constant 0 : index
    %c0_1 = arith.constant 0 : index
    %11 = vector.load %arg3[%c0_0, %c0_1] : memref<64x128xf32, #tpu.memory_space<vmem>>, vector<64x128xf32>
    %cst = arith.constant dense<0.000000e+00> : vector<8x128xf32>
    %12 = tpu.matmul %10, %11, %cst {dimension_numbers = #tpu.dot_dimension_numbers<[1], [0], [0], [1], [0, 0, 1, 1], [], []>} : vector<8x64xf32>, vector<64x128xf32>, vector<8x128xf32> -> vector<8x128xf32>
    %c0_2 = arith.constant 0 : index
    %c0_3 = arith.constant 0 : index
    %13 = vector.load %arg4[%c0_2, %c0_3] : memref<8x128xf32, #tpu.memory_space<vmem>>, vector<8x128xf32>
    %14 = arith.addf %12, %13 : vector<8x128xf32>
    %c0_4 = arith.constant 0 : index
    %c0_5 = arith.constant 0 : index
    %c0_6 = arith.constant 0 : index
    %15 = vector.load %arg5[%c0_4, %c0_5, %c0_6] : memref<1x8x128xf32, #tpu.memory_space<vmem>>, vector<1x8x128xf32>
    %16 = vector.shape_cast %15 : vector<1x8x128xf32> to vector<8x128xf32>
    %17 = vector.shape_cast %14 : vector<8x128xf32> to vector<1x8x128xf32>
    tpu.vector_store %arg5[%c0_4, %c0_5, %c0_6], %17 {strides = array<i32>} : memref<1x8x128xf32, #tpu.memory_space<vmem>>, vector<1x8x128xf32>,
    return
  }
  func.func @transform_0(%arg0: i32, %arg1: i32) -> (i32, i32) {
    %c0_i32 = arith.constant 0 : i32
    %c0_i32_0 = arith.constant 0 : i32
    %c0_i32_1 = arith.constant 0 : i32
    return %c0_i32, %c0_i32_0 : i32, i32
  }
  func.func @transform_1(%arg0: i32, %arg1: i32) -> (i32, i32) {
    %c0_i32 = arith.constant 0 : i32
    %c0_i32_0 = arith.constant 0 : i32
    %c0_i32_1 = arith.constant 0 : i32
    return %c0_i32, %c0_i32_0 : i32, i32
  }
  func.func @transform_2(%arg0: i32, %arg1: i32) -> (i32, i32) {
    %c0_i32 = arith.constant 0 : i32
    %c0_i32_0 = arith.constant 0 : i32
    return %arg0, %c0_i32 : i32, i32
  }
  func.func @transform_3(%arg0: i32, %arg1: i32) -> (i32, i32, i32) {
    %c0_i32 = arith.constant 0 : i32
    %c0_i32_0 = arith.constant 0 : i32
    return %arg1, %arg0, %c0_i32 : i32, i32, i32
  }
}

module attributes {stable_mosaic.version = 11 : i64} {
  func.func @kernel(%arg0: i32, %arg1: i32, %arg2: memref<2x8xi32, #tpu.memory_space<vmem>>, %arg3: memref<64x128xf32, #tpu.memory_space<vmem>>, %arg4: memref<8x128xf32, #tpu.memory_space<vmem>>, %arg5: memref<1x8x128xf32, #tpu.memory_space<vmem>>) attributes {dimension_semantics = [#tpu.dimension_semantics<parallel>, #tpu.dimension_semantics<parallel>], iteration_bounds = array<i64: 1, 2>, scalar_prefetch = 0 : i64, scratch_operands = 0 : i64, tpu.core_type = #tpu.core_type<tc>, window_params = [{pipeline_mode = #tpu.pipeline_mode<synchronous>, transform_indices = @transform_0, window_bounds = array<i64: 2, 8>}, {pipeline_mode = #tpu.pipeline_mode<synchronous>, transform_indices = @transform_1, window_bounds = array<i64: 64, 128>}, {transform_indices = @transform_2, window_bounds = array<i64: 8, 128>}, {transform_indices = @transform_3, window_bounds = array<i64: 1, 8, 128>}]} {
    %c1_i32 = arith.constant 1 : i32
    %0 = arith.muli %arg1, %c1_i32 : i32
    %1 = arith.addi %0, %arg0 : i32
    %2 = arith.index_cast %1 : i32 to index
    %c0 = arith.constant 0 : index
    %3 = vector.load %arg2[%2, %c0] : memref<2x8xi32, #tpu.memory_space<vmem>>, vector<1x8xi32>
    %4 = vector.shape_cast %3 : vector<1x8xi32> to vector<8xi32>
    %5 = vector.shape_cast %4 : vector<8xi32> to vector<8x1xi32>
    %6 = tpu.iota {dimensions = array<i32: 1>} : vector<8x64xi32>
    %7 = vector.broadcast %5 : vector<8x1xi32> to vector<8x64xi32>
    %8 = arith.cmpi eq, %7, %6 : vector<8x64xi32>
    %9 = arith.extui %8 : vector<8x64xi1> to vector<8x64xi32>
    %10 = arith.sitofp %9 : vector<8x64xi32> to vector<8x64xf32>
    %c0_0 = arith.constant 0 : index
    %c0_1 = arith.constant 0 : index
    %11 = vector.load %arg3[%c0_0, %c0_1] : memref<64x128xf32, #tpu.memory_space<vmem>>, vector<64x128xf32>
    %cst = arith.constant dense<0.000000e+00> : vector<8x128xf32>
    %12 = tpu.matmul %10, %11, %cst {dimension_numbers = #tpu.dot_dimension_numbers<[1], [0], [0], [1], [0, 0, 1, 1], [], []>} : vector<8x64xf32>, vector<64x128xf32>, vector<8x128xf32> -> vector<8x128xf32>
    %c0_2 = arith.constant 0 : index
    %c0_3 = arith.constant 0 : index
    %13 = vector.load %arg4[%c0_2, %c0_3] : memref<8x128xf32, #tpu.memory_space<vmem>>, vector<8x128xf32>
    %14 = arith.addf %12, %13 : vector<8x128xf32>
    %c0_4 = arith.constant 0 : index
    %c0_5 = arith.constant 0 : index
    %c0_6 = arith.constant 0 : index
    %15 = vector.load %arg5[%c0_4, %c0_5, %c0_6] : memref<1x8x128xf32, #tpu.memory_space<vmem>>, vector<1x8x128xf32>
    %16 = vector.shape_cast %15 : vector<1x8x128xf32> to vector<8x128xf32>
    %17 = vector.shape_cast %14 : vector<8x128xf32> to vector<1x8x128xf32>
    tpu.vector_store %arg5[%c0_4, %c0_5, %c0_6], %17 {strides = array<i32>} : memref<1x8x128xf32, #tpu.memory_space<vmem>>, vector<1x8x128xf32>,
    return
  }
  func.func @transform_0(%arg0: i32, %arg1: i32) -> (i32, i32) {
    %c0_i32 = arith.constant 0 : i32
    %c0_i32_0 = arith.constant 0 : i32
    %c0_i32_1 = arith.constant 0 : i32
    return %c0_i32, %c0_i32_0 : i32, i32
  }
  func.func @transform_1(%arg0: i32, %arg1: i32) -> (i32, i32) {
    %c0_i32 = arith.constant 0 : i32
    %c0_i32_0 = arith.constant 0 : i32
    %c0_i32_1 = arith.constant 0 : i32
    return %c0_i32, %c0_i32_0 : i32, i32
  }
  func.func @transform_2(%arg0: i32, %arg1: i32) -> (i32, i32) {
    %c0_i32 = arith.constant 0 : i32
    %c0_i32_0 = arith.constant 0 : i32
    return %arg0, %c0_i32 : i32, i32
  }
  func.func @transform_3(%arg0: i32, %arg1: i32) -> (i32, i32, i32) {
    %c0_i32 = arith.constant 0 : i32
    %c0_i32_0 = arith.constant 0 : i32
    return %arg1, %arg0, %c0_i32 : i32, i32, i32
  }
}

module attributes {stable_mosaic.version = 11 : i64} {
  func.func @kernel(%arg0: i32, %arg1: i32, %arg2: memref<16xi32, #tpu.memory_space<smem>>, %arg3: memref<64x128xf32, #tpu.memory_space<any>>, %arg4: memref<8x128xf32, #tpu.memory_space<vmem>>, %arg5: memref<1x8x128xf32, #tpu.memory_space<vmem>>, %arg6: memref<8x128xf32, #tpu.memory_space<vmem>>, %arg7: memref<8x!tpu.dma_semaphore, #tpu.memory_space<semaphore_mem>>) attributes {dimension_semantics = [#tpu.dimension_semantics<parallel>, #tpu.dimension_semantics<parallel>], iteration_bounds = array<i64: 1, 2>, scalar_prefetch = 1 : i64, scratch_operands = 2 : i64, tpu.core_type = #tpu.core_type<tc>, window_params = [{}, {transform_indices = @transform_1, window_bounds = array<i64: 8, 128>}, {transform_indices = @transform_2, window_bounds = array<i64: 1, 8, 128>}]} {
    %c8_i32 = arith.constant 8 : i32
    %0 = arith.muli %arg1, %c8_i32 : i32
    %c8_i32_0 = arith.constant 8 : i32
    %1 = arith.muli %arg0, %c8_i32_0 : i32
    %2 = arith.addi %0, %1 : i32
    %c0_i32 = arith.constant 0 : i32
    %3 = arith.addi %2, %c0_i32 : i32
    %4 = arith.index_cast %3 : i32 to index
    %5 = memref.load %arg2[%4] : memref<16xi32, #tpu.memory_space<smem>>
    %c0_i32_1 = arith.constant 0 : i32
    %c63_i32 = arith.constant 63 : i32
    %6 = arith.maxsi %c0_i32_1, %5 : i32
    %7 = arith.minsi %c63_i32, %6 : i32
    %c0_i32_2 = arith.constant 0 : i32
    %c0_i32_3 = arith.constant 0 : i32
    %8 = tpu.memref_slice %arg3[%7, %c0_i32_3] : memref<64x128xf32, #tpu.memory_space<any>> -> memref<1x128xf32, #tpu.memory_space<any>>
    %c0_i32_4 = arith.constant 0 : i32
    %c0_i32_5 = arith.constant 0 : i32
    %9 = tpu.memref_slice %arg6[%c0_i32_4, %c0_i32_5] : memref<8x128xf32, #tpu.memory_space<vmem>> -> memref<1x128xf32, #tpu.memory_space<vmem>>
    %10 = tpu.memref_slice %arg7[%c0_i32_2] : memref<8x!tpu.dma_semaphore, #tpu.memory_space<semaphore_mem>> -> memref<1x!tpu.dma_semaphore, #tpu.memory_space<semaphore_mem>>
    %11 = tpu.memref_squeeze %10 : memref<1x!tpu.dma_semaphore, #tpu.memory_space<semaphore_mem>> -> memref<!tpu.dma_semaphore, #tpu.memory_space<semaphore_mem>>
    tpu.enqueue_dma source(%8 : memref<1x128xf32, #tpu.memory_space<any>>) target(%9 : memref<1x128xf32, #tpu.memory_space<vmem>>) target_semaphore(%11 : memref<!tpu.dma_semaphore, #tpu.memory_space<semaphore_mem>>)
    %c1_i32 = arith.constant 1 : i32
    %12 = arith.addi %2, %c1_i32 : i32
    %13 = arith.index_cast %12 : i32 to index
    %14 = memref.load %arg2[%13] : memref<16xi32, #tpu.memory_space<smem>>
    %c0_i32_6 = arith.constant 0 : i32
    %c63_i32_7 = arith.constant 63 : i32
    %15 = arith.maxsi %c0_i32_6, %14 : i32
    %16 = arith.minsi %c63_i32_7, %15 : i32
    %c1_i32_8 = arith.constant 1 : i32
    %c0_i32_9 = arith.constant 0 : i32
    %17 = tpu.memref_slice %arg3[%16, %c0_i32_9] : memref<64x128xf32, #tpu.memory_space<any>> -> memref<1x128xf32, #tpu.memory_space<any>>
    %c1_i32_10 = arith.constant 1 : i32
    %c0_i32_11 = arith.constant 0 : i32
    %18 = tpu.memref_slice %arg6[%c1_i32_10, %c0_i32_11] : memref<8x128xf32, #tpu.memory_space<vmem>> -> memref<1x128xf32, #tpu.memory_space<vmem>>
    %19 = tpu.memref_slice %arg7[%c1_i32_8] : memref<8x!tpu.dma_semaphore, #tpu.memory_space<semaphore_mem>> -> memref<1x!tpu.dma_semaphore, #tpu.memory_space<semaphore_mem>>
    %20 = tpu.memref_squeeze %19 : memref<1x!tpu.dma_semaphore, #tpu.memory_space<semaphore_mem>> -> memref<!tpu.dma_semaphore, #tpu.memory_space<semaphore_mem>>
    tpu.enqueue_dma source(%17 : memref<1x128xf32, #tpu.memory_space<any>>) target(%18 : memref<1x128xf32, #tpu.memory_space<vmem>>) target_semaphore(%20 : memref<!tpu.dma_semaphore, #tpu.memory_space<semaphore_mem>>)
    %c2_i32 = arith.constant 2 : i32
    %21 = arith.addi %2, %c2_i32 : i32
    %22 = arith.index_cast %21 : i32 to index
    %23 = memref.load %arg2[%22] : memref<16xi32, #tpu.memory_space<smem>>
    %c0_i32_12 = arith.constant 0 : i32
    %c63_i32_13 = arith.constant 63 : i32
    %24 = arith.maxsi %c0_i32_12, %23 : i32
    %25 = arith.minsi %c63_i32_13, %24 : i32
    %c2_i32_14 = arith.constant 2 : i32
    %c0_i32_15 = arith.constant 0 : i32
    %26 = tpu.memref_slice %arg3[%25, %c0_i32_15] : memref<64x128xf32, #tpu.memory_space<any>> -> memref<1x128xf32, #tpu.memory_space<any>>
    %c2_i32_16 = arith.constant 2 : i32
    %c0_i32_17 = arith.constant 0 : i32
    %27 = tpu.memref_slice %arg6[%c2_i32_16, %c0_i32_17] : memref<8x128xf32, #tpu.memory_space<vmem>> -> memref<1x128xf32, #tpu.memory_space<vmem>>
    %28 = tpu.memref_slice %arg7[%c2_i32_14] : memref<8x!tpu.dma_semaphore, #tpu.memory_space<semaphore_mem>> -> memref<1x!tpu.dma_semaphore, #tpu.memory_space<semaphore_mem>>
    %29 = tpu.memref_squeeze %28 : memref<1x!tpu.dma_semaphore, #tpu.memory_space<semaphore_mem>> -> memref<!tpu.dma_semaphore, #tpu.memory_space<semaphore_mem>>
    tpu.enqueue_dma source(%26 : memref<1x128xf32, #tpu.memory_space<any>>) target(%27 : memref<1x128xf32, #tpu.memory_space<vmem>>) target_semaphore(%29 : memref<!tpu.dma_semaphore, #tpu.memory_space<semaphore_mem>>)
    %c3_i32 = arith.constant 3 : i32
    %30 = arith.addi %2, %c3_i32 : i32
    %31 = arith.index_cast %30 : i32 to index
    %32 = memref.load %arg2[%31] : memref<16xi32, #tpu.memory_space<smem>>
    %c0_i32_18 = arith.constant 0 : i32
    %c63_i32_19 = arith.constant 63 : i32
    %33 = arith.maxsi %c0_i32_18, %32 : i32
    %34 = arith.minsi %c63_i32_19, %33 : i32
    %c3_i32_20 = arith.constant 3 : i32
    %c0_i32_21 = arith.constant 0 : i32
    %35 = tpu.memref_slice %arg3[%34, %c0_i32_21] : memref<64x128xf32, #tpu.memory_space<any>> -> memref<1x128xf32, #tpu.memory_space<any>>
    %c3_i32_22 = arith.constant 3 : i32
    %c0_i32_23 = arith.constant 0 : i32
    %36 = tpu.memref_slice %arg6[%c3_i32_22, %c0_i32_23] : memref<8x128xf32, #tpu.memory_space<vmem>> -> memref<1x128xf32, #tpu.memory_space<vmem>>
    %37 = tpu.memref_slice %arg7[%c3_i32_20] : memref<8x!tpu.dma_semaphore, #tpu.memory_space<semaphore_mem>> -> memref<1x!tpu.dma_semaphore, #tpu.memory_space<semaphore_mem>>
    %38 = tpu.memref_squeeze %37 : memref<1x!tpu.dma_semaphore, #tpu.memory_space<semaphore_mem>> -> memref<!tpu.dma_semaphore, #tpu.memory_space<semaphore_mem>>
    tpu.enqueue_dma source(%35 : memref<1x128xf32, #tpu.memory_space<any>>) target(%36 : memref<1x128xf32, #tpu.memory_space<vmem>>) target_semaphore(%38 : memref<!tpu.dma_semaphore, #tpu.memory_space<semaphore_mem>>)
    %c4_i32 = arith.constant 4 : i32
    %39 = arith.addi %2, %c4_i32 : i32
    %40 = arith.index_cast %39 : i32 to index
    %41 = memref.load %arg2[%40] : memref<16xi32, #tpu.memory_space<smem>>
    %c0_i32_24 = arith.constant 0 : i32
    %c63_i32_25 = arith.constant 63 : i32
    %42 = arith.maxsi %c0_i32_24, %41 : i32
    %43 = arith.minsi %c63_i32_25, %42 : i32
    %c4_i32_26 = arith.constant 4 : i32
    %c0_i32_27 = arith.constant 0 : i32
    %44 = tpu.memref_slice %arg3[%43, %c0_i32_27] : memref<64x128xf32, #tpu.memory_space<any>> -> memref<1x128xf32, #tpu.memory_space<any>>
    %c4_i32_28 = arith.constant 4 : i32
    %c0_i32_29 = arith.constant 0 : i32
    %45 = tpu.memref_slice %arg6[%c4_i32_28, %c0_i32_29] : memref<8x128xf32, #tpu.memory_space<vmem>> -> memref<1x128xf32, #tpu.memory_space<vmem>>
    %46 = tpu.memref_slice %arg7[%c4_i32_26] : memref<8x!tpu.dma_semaphore, #tpu.memory_space<semaphore_mem>> -> memref<1x!tpu.dma_semaphore, #tpu.memory_space<semaphore_mem>>
    %47 = tpu.memref_squeeze %46 : memref<1x!tpu.dma_semaphore, #tpu.memory_space<semaphore_mem>> -> memref<!tpu.dma_semaphore, #tpu.memory_space<semaphore_mem>>
    tpu.enqueue_dma source(%44 : memref<1x128xf32, #tpu.memory_space<any>>) target(%45 : memref<1x128xf32, #tpu.memory_space<vmem>>) target_semaphore(%47 : memref<!tpu.dma_semaphore, #tpu.memory_space<semaphore_mem>>)
    %c5_i32 = arith.constant 5 : i32
    %48 = arith.addi %2, %c5_i32 : i32
    %49 = arith.index_cast %48 : i32 to index
    %50 = memref.load %arg2[%49] : memref<16xi32, #tpu.memory_space<smem>>
    %c0_i32_30 = arith.constant 0 : i32
    %c63_i32_31 = arith.constant 63 : i32
    %51 = arith.maxsi %c0_i32_30, %50 : i32
    %52 = arith.minsi %c63_i32_31, %51 : i32
    %c5_i32_32 = arith.constant 5 : i32
    %c0_i32_33 = arith.constant 0 : i32
    %53 = tpu.memref_slice %arg3[%52, %c0_i32_33] : memref<64x128xf32, #tpu.memory_space<any>> -> memref<1x128xf32, #tpu.memory_space<any>>
    %c5_i32_34 = arith.constant 5 : i32
    %c0_i32_35 = arith.constant 0 : i32
    %54 = tpu.memref_slice %arg6[%c5_i32_34, %c0_i32_35] : memref<8x128xf32, #tpu.memory_space<vmem>> -> memref<1x128xf32, #tpu.memory_space<vmem>>
    %55 = tpu.memref_slice %arg7[%c5_i32_32] : memref<8x!tpu.dma_semaphore, #tpu.memory_space<semaphore_mem>> -> memref<1x!tpu.dma_semaphore, #tpu.memory_space<semaphore_mem>>
    %56 = tpu.memref_squeeze %55 : memref<1x!tpu.dma_semaphore, #tpu.memory_space<semaphore_mem>> -> memref<!tpu.dma_semaphore, #tpu.memory_space<semaphore_mem>>
    tpu.enqueue_dma source(%53 : memref<1x128xf32, #tpu.memory_space<any>>) target(%54 : memref<1x128xf32, #tpu.memory_space<vmem>>) target_semaphore(%56 : memref<!tpu.dma_semaphore, #tpu.memory_space<semaphore_mem>>)
    %c6_i32 = arith.constant 6 : i32
    %57 = arith.addi %2, %c6_i32 : i32
    %58 = arith.index_cast %57 : i32 to index
    %59 = memref.load %arg2[%58] : memref<16xi32, #tpu.memory_space<smem>>
    %c0_i32_36 = arith.constant 0 : i32
    %c63_i32_37 = arith.constant 63 : i32
    %60 = arith.maxsi %c0_i32_36, %59 : i32
    %61 = arith.minsi %c63_i32_37, %60 : i32
    %c6_i32_38 = arith.constant 6 : i32
    %c0_i32_39 = arith.constant 0 : i32
    %62 = tpu.memref_slice %arg3[%61, %c0_i32_39] : memref<64x128xf32, #tpu.memory_space<any>> -> memref<1x128xf32, #tpu.memory_space<any>>
    %c6_i32_40 = arith.constant 6 : i32
    %c0_i32_41 = arith.constant 0 : i32
    %63 = tpu.memref_slice %arg6[%c6_i32_40, %c0_i32_41] : memref<8x128xf32, #tpu.memory_space<vmem>> -> memref<1x128xf32, #tpu.memory_space<vmem>>
    %64 = tpu.memref_slice %arg7[%c6_i32_38] : memref<8x!tpu.dma_semaphore, #tpu.memory_space<semaphore_mem>> -> memref<1x!tpu.dma_semaphore, #tpu.memory_space<semaphore_mem>>
    %65 = tpu.memref_squeeze %64 : memref<1x!tpu.dma_semaphore, #tpu.memory_space<semaphore_mem>> -> memref<!tpu.dma_semaphore, #tpu.memory_space<semaphore_mem>>
    tpu.enqueue_dma source(%62 : memref<1x128xf32, #tpu.memory_space<any>>) target(%63 : memref<1x128xf32, #tpu.memory_space<vmem>>) target_semaphore(%65 : memref<!tpu.dma_semaphore, #tpu.memory_space<semaphore_mem>>)
    %c7_i32 = arith.constant 7 : i32
    %66 = arith.addi %2, %c7_i32 : i32
    %67 = arith.index_cast %66 : i32 to index
    %68 = memref.load %arg2[%67] : memref<16xi32, #tpu.memory_space<smem>>
    %c0_i32_42 = arith.constant 0 : i32
    %c63_i32_43 = arith.constant 63 : i32
    %69 = arith.maxsi %c0_i32_42, %68 : i32
    %70 = arith.minsi %c63_i32_43, %69 : i32
    %c7_i32_44 = arith.constant 7 : i32
    %c0_i32_45 = arith.constant 0 : i32
    %71 = tpu.memref_slice %arg3[%70, %c0_i32_45] : memref<64x128xf32, #tpu.memory_space<any>> -> memref<1x128xf32, #tpu.memory_space<any>>
    %c7_i32_46 = arith.constant 7 : i32
    %c0_i32_47 = arith.constant 0 : i32
    %72 = tpu.memref_slice %arg6[%c7_i32_46, %c0_i32_47] : memref<8x128xf32, #tpu.memory_space<vmem>> -> memref<1x128xf32, #tpu.memory_space<vmem>>
    %73 = tpu.memref_slice %arg7[%c7_i32_44] : memref<8x!tpu.dma_semaphore, #tpu.memory_space<semaphore_mem>> -> memref<1x!tpu.dma_semaphore, #tpu.memory_space<semaphore_mem>>
    %74 = tpu.memref_squeeze %73 : memref<1x!tpu.dma_semaphore, #tpu.memory_space<semaphore_mem>> -> memref<!tpu.dma_semaphore, #tpu.memory_space<semaphore_mem>>
    tpu.enqueue_dma source(%71 : memref<1x128xf32, #tpu.memory_space<any>>) target(%72 : memref<1x128xf32, #tpu.memory_space<vmem>>) target_semaphore(%74 : memref<!tpu.dma_semaphore, #tpu.memory_space<semaphore_mem>>)
    %c0_i32_48 = arith.constant 0 : i32
    %c8_i32_49 = arith.constant 8 : i32
    %75 = arith.addi %c0_i32_48, %c8_i32_49 : i32
    %c1_i32_50 = arith.constant 1 : i32
    scf.for %arg8 = %c0_i32_48 to %75 step %c1_i32_50  : i32 {
      %c8_i32_58 = arith.constant 8 : i32
      %c0_i32_59 = arith.constant 0 : i32
      %82 = arith.cmpi eq, %c8_i32_58, %c0_i32_59 : i32
      %c1_i32_60 = arith.constant 1 : i32
      %83 = arith.select %82, %c1_i32_60, %c8_i32_58 : i32
      %84 = arith.remsi %arg8, %83 : i32
      %c0_i32_61 = arith.constant 0 : i32
      %85 = arith.cmpi ne, %84, %c0_i32_61 : i32
      %c0_i32_62 = arith.constant 0 : i32
      %86 = arith.cmpi slt, %84, %c0_i32_62 : i32
      %c0_i32_63 = arith.constant 0 : i32
      %87 = arith.cmpi slt, %83, %c0_i32_63 : i32
      %88 = arith.xori %86, %87 : i1
      %89 = arith.andi %88, %85 : i1
      %90 = arith.addi %84, %83 : i32
      %91 = arith.select %89, %90, %84 : i32
      %c0_i32_64 = arith.constant 0 : i32
      %c0_i32_65 = arith.constant 0 : i32
      %92 = tpu.memref_slice %arg3[%c0_i32_64, %c0_i32_65] : memref<64x128xf32, #tpu.memory_space<any>> -> memref<1x128xf32, #tpu.memory_space<any>>
      %c0_i32_66 = arith.constant 0 : i32
      %93 = tpu.memref_slice %arg6[%arg8, %c0_i32_66] : memref<8x128xf32, #tpu.memory_space<vmem>> -> memref<1x128xf32, #tpu.memory_space<vmem>>
      %94 = tpu.memref_slice %arg7[%91] : memref<8x!tpu.dma_semaphore, #tpu.memory_space<semaphore_mem>> -> memref<1x!tpu.dma_semaphore, #tpu.memory_space<semaphore_mem>>
      %95 = tpu.memref_squeeze %94 : memref<1x!tpu.dma_semaphore, #tpu.memory_space<semaphore_mem>> -> memref<!tpu.dma_semaphore, #tpu.memory_space<semaphore_mem>>
      tpu.wait_dma2 semaphore(%95 : memref<!tpu.dma_semaphore, #tpu.memory_space<semaphore_mem>>) src(%92 : memref<1x128xf32, #tpu.memory_space<any>>) dst(%93 : memref<1x128xf32, #tpu.memory_space<vmem>>)
      %c8_i32_67 = arith.constant 8 : i32
      %96 = arith.addi %arg8, %c8_i32_67 : i32
      %c8_i32_68 = arith.constant 8 : i32
      %97 = arith.cmpi slt, %96, %c8_i32_68 : i32
      %98 = arith.extui %97 : i1 to i32
      %c0_i32_69 = arith.constant 0 : i32
      %99 = arith.cmpi ne, %98, %c0_i32_69 : i32
      scf.if %99 {
        %c8_i32_70 = arith.constant 8 : i32
        %100 = arith.addi %arg8, %c8_i32_70 : i32
        %101 = arith.addi %2, %100 : i32
        %102 = arith.index_cast %101 : i32 to index
        %103 = memref.load %arg2[%102] : memref<16xi32, #tpu.memory_space<smem>>
        %c0_i32_71 = arith.constant 0 : i32
        %c63_i32_72 = arith.constant 63 : i32
        %104 = arith.maxsi %c0_i32_71, %103 : i32
        %105 = arith.minsi %c63_i32_72, %104 : i32
        %c8_i32_73 = arith.constant 8 : i32
        %c0_i32_74 = arith.constant 0 : i32
        %106 = arith.cmpi eq, %c8_i32_73, %c0_i32_74 : i32
        %c1_i32_75 = arith.constant 1 : i32
        %107 = arith.select %106, %c1_i32_75, %c8_i32_73 : i32
        %108 = arith.remsi %100, %107 : i32
        %c0_i32_76 = arith.constant 0 : i32
        %109 = arith.cmpi ne, %108, %c0_i32_76 : i32
        %c0_i32_77 = arith.constant 0 : i32
        %110 = arith.cmpi slt, %108, %c0_i32_77 : i32
        %c0_i32_78 = arith.constant 0 : i32
        %111 = arith.cmpi slt, %107, %c0_i32_78 : i32
        %112 = arith.xori %110, %111 : i1
        %113 = arith.andi %112, %109 : i1
        %114 = arith.addi %108, %107 : i32
        %115 = arith.select %113, %114, %108 : i32
        %c0_i32_79 = arith.constant 0 : i32
        %116 = tpu.memref_slice %arg3[%105, %c0_i32_79] : memref<64x128xf32, #tpu.memory_space<any>> -> memref<1x128xf32, #tpu.memory_space<any>>
        %c0_i32_80 = arith.constant 0 : i32
        %117 = tpu.memref_slice %arg6[%100, %c0_i32_80] : memref<8x128xf32, #tpu.memory_space<vmem>> -> memref<1x128xf32, #tpu.memory_space<vmem>>
        %118 = tpu.memref_slice %arg7[%115] : memref<8x!tpu.dma_semaphore, #tpu.memory_space<semaphore_mem>> -> memref<1x!tpu.dma_semaphore, #tpu.memory_space<semaphore_mem>>
        %119 = tpu.memref_squeeze %118 : memref<1x!tpu.dma_semaphore, #tpu.memory_space<semaphore_mem>> -> memref<!tpu.dma_semaphore, #tpu.memory_space<semaphore_mem>>
        tpu.enqueue_dma source(%116 : memref<1x128xf32, #tpu.memory_space<any>>) target(%117 : memref<1x128xf32, #tpu.memory_space<vmem>>) target_semaphore(%119 : memref<!tpu.dma_semaphore, #tpu.memory_space<semaphore_mem>>)
      } else {
      }
    }
    %c8_i32_51 = arith.constant 8 : i32
    %c0 = arith.constant 0 : index
    %c0_52 = arith.constant 0 : index
    %76 = vector.load %arg6[%c0, %c0_52] : memref<8x128xf32, #tpu.memory_space<vmem>>, vector<8x128xf32>
    %c0_53 = arith.constant 0 : index
    %c0_54 = arith.constant 0 : index
    %77 = vector.load %arg4[%c0_53, %c0_54] : memref<8x128xf32, #tpu.memory_space<vmem>>, vector<8x128xf32>
    %78 = arith.addf %76, %77 : vector<8x128xf32>
    %c0_55 = arith.constant 0 : index
    %c0_56 = arith.constant 0 : index
    %c0_57 = arith.constant 0 : index
    %79 = vector.load %arg5[%c0_55, %c0_56, %c0_57] : memref<1x8x128xf32, #tpu.memory_space<vmem>>, vector<1x8x128xf32>
    %80 = vector.shape_cast %79 : vector<1x8x128xf32> to vector<8x128xf32>
    %81 = vector.shape_cast %78 : vector<8x128xf32> to vector<1x8x128xf32>
    tpu.vector_store %arg5[%c0_55, %c0_56, %c0_57], %81 {strides = array<i32>} : memref<1x8x128xf32, #tpu.memory_space<vmem>>, vector<1x8x128xf32>,
    return
  }
  func.func @transform_1(%arg0: i32, %arg1: i32, %arg2: memref<16xi32, #tpu.memory_space<smem>>) -> (i32, i32) {
    %c0_i32 = arith.constant 0 : i32
    %c0_i32_0 = arith.constant 0 : i32
    return %arg0, %c0_i32 : i32, i32
  }
  func.func @transform_2(%arg0: i32, %arg1: i32, %arg2: memref<16xi32, #tpu.memory_space<smem>>) -> (i32, i32, i32) {
    %c0_i32 = arith.constant 0 : i32
    %c0_i32_0 = arith.constant 0 : i32
    return %arg1, %arg0, %c0_i32 : i32, i32, i32
  }
}

</mosaic_0001>

<llo_original>
// kernel: tpu_custom_call.1
$region0: #{tpu_custom_call.1}
  #allocation0 [shape = 'u32[]', space=smem, size = 0x4, offset = 0x4, fixed_abs, tag = 'smem constant byte address 0x4 - core index']
  #allocation1 [shape = 'u32[72,128]{1,0:T(1,128)}', space=vmem, size = 0x9000, scoped, tag = 'internal scratch']
  %s0 = inlined_call_operand.hbm [shape: s32[2,8], index: 0, kind: input, shape index: {}]
  %s1 = inlined_call_operand.hbm [shape: f32[64,128], index: 1, kind: input, shape index: {}]
  %s2 = inlined_call_operand.hbm [shape: f32[8,128], index: 2, kind: input, shape index: {}]
  %s3 = inlined_call_operand.hbm [shape: f32[2,8,128], index: 3, kind: output, shape index: {}]
  %s4 = sld [smem:[#allocation0]]
  $region57: #{tpu_custom_call.1} parent=0
    _
  %s6 = ssub.s32 1, %s4
  %s7 = scalar_select 0, %s6, %s4
  $region1: #{tpu_custom_call.1} parent=0
    #allocation2 [shape = 'u8[1024]{0}', space=vmem, size = 0x400, scoped, tag = 'input window, operand 0, single buffered']
    #allocation3 [shape = 's32[2]{0}', space=sflag, size = 0x8, scoped, tag = 'scoped memory for tpu_custom_call.1']
    #allocation4 [shape = 's32[2]{0}', space=sflag, size = 0x8, scoped, tag = 'scoped memory for tpu_custom_call.1']
    #allocation5 [shape = 'u8[32768]{0}', space=vmem, size = 0x8000, scoped, tag = 'input window, operand 1, single buffered']
    #allocation6 [shape = 's32[1]{0}', space=sflag, size = 0x4, scoped, tag = 'scoped memory for tpu_custom_call.1']
    #allocation7 [shape = 'u8[4096]{0}', space=vmem, size = 0x1000, scoped, tag = 'input window, operand 2, single buffered']
    #allocation8 [shape = 'u8[8192]{0}', space=vmem, size = 0x2000, scoped, tag = 'output window, operand 0']
    %8 = vsyncpa [#allocation3], 0
    %9 = vsyncpa [#allocation6], 0
    %10 = vsyncpa [#allocation4], 0
    %s11 = scalar_lea.sflag [#allocation4], 1
    %12 = vsyncpa %s11, 0
    loop: start=0, step=1, limit=4
    $region2: #{tpu_custom_call.1} parent=1 // loop_pre_header
      _
    $region3: #{tpu_custom_call.1} parent=1 // loop_header
      %s14 = sphi 0, %s18
      %p15 = scmp.ge.s32.totalorder %s14, 4
      %s21 = sphi 0, %s33
      %s22 = sphi 0, %s29
      %s23 = sphi 0, %s21
      %s24 = sphi 0, %s22
      %s25 = sphi 0, %s23
      %s26 = sphi 0, %s24
      %s34 = sphi 0, %s34
      %s36 = sphi 0, %s34
      %s37 = sphi 0, %s36
      %s51 = sphi 0, %s37
      %s55 = sphi 0, %s55
      %s57 = sphi 0, %s55
      %s58 = sphi 0, %s57
      %s72 = sphi 0, %s58
      %s78 = sphi 0, %s80
      %s81 = sphi 0, %s78
      %s82 = sphi 0, %s81
      %s98 = sphi 0, %s82
      %s106 = sphi 0, %s108
      %s109 = sphi 0, %s106
      %s110 = sphi 0, %s109
      %s126 = sphi 0, %s110
    $region4: #{tpu_custom_call.1} parent=1 // loop_header_branch
      %17 = sbr.rel (%p15) target = $region8
    $region5: #{tpu_custom_call.1} parent=1 // loop_body
      %s19 = ssub.s32 %s14, 1
      %s20 = ssub.s32 %s14, 2
      %s27 = sadd.s32 1, %s22
      %p28 = scmp.ge.s32.totalorder %s27, 2
      %s29 = scalar_select %p28, 0, %s27
      %s30 = sadd.s32 1, %s21
      %s31 = scalar_select %p28, %s30, %s21
      %p32 = scmp.ge.s32.totalorder %s31, 1
      %s33 = scalar_select %p32, 0, %s31
      %s35 = sadd.s32 %s34, 1
      %p38 = scmp.eq.s32.totalorder %s14, 1
      %p39 = scmp.ne.s32.totalorder %s34, %s36
      %p40 = scmp.eq.s32.totalorder %s14, 0
      %p41 = por %p39, %p40
      %p42 = scmp.ne.s32.totalorder %s34, %s36
      %p43 = scmp.eq.s32.totalorder %s19, 1
      %p44 = por %p42, %p43
      %p45 = scmp.ne.s32.totalorder %s36, %s37
      %p46 = scmp.eq.s32.totalorder %s19, 0
      %p47 = por %p45, %p46
      %p48 = scmp.ne.s32.totalorder %s36, %s37
      %p49 = scmp.eq.s32.totalorder %s20, 1
      %p50 = por %p48, %p49
      %p52 = scmp.ne.s32.totalorder %s37, %s51
      %p53 = scmp.eq.s32.totalorder %s20, 0
      %p54 = por %p52, %p53
      %s56 = sadd.s32 %s55, 1
      %p59 = scmp.eq.s32.totalorder %s14, 1
      %p60 = scmp.ne.s32.totalorder %s55, %s57
      %p61 = scmp.eq.s32.totalorder %s14, 0
      %p62 = por %p60, %p61
      %p63 = scmp.ne.s32.totalorder %s55, %s57
      %p64 = scmp.eq.s32.totalorder %s19, 1
      %p65 = por %p63, %p64
      %p66 = scmp.ne.s32.totalorder %s57, %s58
      %p67 = scmp.eq.s32.totalorder %s19, 0
      %p68 = por %p66, %p67
      %p69 = scmp.ne.s32.totalorder %s57, %s58
      %p70 = scmp.eq.s32.totalorder %s20, 1
      %p71 = por %p69, %p70
      %p73 = scmp.ne.s32.totalorder %s58, %s72
      %p74 = scmp.eq.s32.totalorder %s20, 0
      %p75 = por %p73, %p74
      %s76 = ssub.s32 %s21, %s33
      %p77 = scmp.eq.s32.totalorder %s76, 0
      %s79 = sadd.s32 %s78, 1
      %s80 = scalar_select %p77, %s78, %s79
      %p83 = pneg %p77
      %p84 = scmp.eq.s32.totalorder %s14, 1
      %p85 = por %p83, %p84
      %p86 = scmp.ne.s32.totalorder %s78, %s81
      %p87 = scmp.eq.s32.totalorder %s14, 0
      %p88 = por %p86, %p87
      %p89 = scmp.ne.s32.totalorder %s78, %s81
      %p90 = scmp.eq.s32.totalorder %s19, 1
      %p91 = por %p89, %p90
      %p92 = scmp.ne.s32.totalorder %s81, %s82
      %p93 = scmp.eq.s32.totalorder %s19, 0
      %p94 = por %p92, %p93
      %p95 = scmp.ne.s32.totalorder %s81, %s82
      %p96 = scmp.eq.s32.totalorder %s20, 1
      %p97 = por %p95, %p96
      %p99 = scmp.ne.s32.totalorder %s82, %s98
      %p100 = scmp.eq.s32.totalorder %s20, 0
      %p101 = por %p99, %p100
      %s102 = ssub.s32 %s22, %s29
      %s103 = ssub.s32 %s21, %s33
      %s104 = sor.u32 %s102, %s103
      %p105 = scmp.eq.s32.totalorder %s104, 0
      %s107 = sadd.s32 %s106, 1
      %s108 = scalar_select %p105, %s106, %s107
      %p111 = pneg %p105
      %p112 = scmp.eq.s32.totalorder %s14, 1
      %p113 = por %p111, %p112
      %p114 = scmp.ne.s32.totalorder %s106, %s109
      %p115 = scmp.eq.s32.totalorder %s14, 0
      %p116 = por %p114, %p115
      %p117 = scmp.ne.s32.totalorder %s106, %s109
      %p118 = scmp.eq.s32.totalorder %s19, 1
      %p119 = por %p117, %p118
      %p120 = scmp.ne.s32.totalorder %s109, %s110
      %p121 = scmp.eq.s32.totalorder %s19, 0
      %p122 = por %p120, %p121
      %p123 = scmp.ne.s32.totalorder %s109, %s110
      %p124 = scmp.eq.s32.totalorder %s20, 1
      %p125 = por %p123, %p124
      %p127 = scmp.ne.s32.totalorder %s110, %s126
      %p128 = scmp.eq.s32.totalorder %s20, 0
      %p129 = por %p127, %p128
      %p130 = scmp.le.s32.totalorder 1, %s14
      %p131 = scmp.lt.s32.totalorder %s14, 3
      %p132 = pnand %p130, %p131
      %p133 = pneg %p132
      // Predicated region
      $region9: #{tpu_custom_call.1} parent=5 // pred_check
        _
      $region10: #{tpu_custom_call.1} parent=5 // pred_check_branch
        %135 = sbr.rel (%p132) target = $region12
      $region11: #{tpu_custom_call.1} parent=5 // pred_region
        %s136 = ssub.s32 %s14, 1
        // Predicated region
        $region13: #{tpu_custom_call.1} parent=11 // pred_check
          %p137 = pneg %p47
        $region14: #{tpu_custom_call.1} parent=11 // pred_check_branch
          %139 = sbr.rel (%p137) target = $region16
        $region15: #{tpu_custom_call.1} parent=11 // pred_region
          %141 = vsyncadd [#allocation3], 0
          %s143 = sshll.u32 %s0, 4
          %s144 = int_to_ptr.hbm [resolvable:$true] %s143
          %s145 = sshll.u32 [#allocation2], 4
          %s146 = int_to_ptr.vmem [resolvable:$true] %s145
          %148 = dma.hbm_to_vmem [thread:$0]  %s144, 32, %s146, [#allocation3]
        $region16: #{tpu_custom_call.1} parent=11 // pred_fallthru
          _
        // Predicated region
        $region17: #{tpu_custom_call.1} parent=11 // pred_check
          %p149 = pneg %p68
        $region18: #{tpu_custom_call.1} parent=11 // pred_check_branch
          %151 = sbr.rel (%p149) target = $region20
        $region19: #{tpu_custom_call.1} parent=11 // pred_region
          %153 = vsyncadd [#allocation6], 0
          %s154 = sshll.u32 %s1, 4
          %s155 = int_to_ptr.hbm [resolvable:$true] %s154
          %s156 = sshll.u32 [#allocation5], 4
          %s157 = int_to_ptr.vmem [resolvable:$true] %s156
          %162 = dma.hbm_to_vmem [thread:$0]  %s155, 1024, %s157, [#allocation6], 128, 128, 8
        $region20: #{tpu_custom_call.1} parent=11 // pred_fallthru
          _
        // Predicated region
        $region21: #{tpu_custom_call.1} parent=11 // pred_check
          %p163 = pneg %p94
        $region22: #{tpu_custom_call.1} parent=11 // pred_check_branch
          %165 = sbr.rel (%p163) target = $region24
        $region23: #{tpu_custom_call.1} parent=11 // pred_region
          %167 = vsyncadd [#allocation6], 0
          %s168 = smul.addr %s23, 8
          %s169 = scalar_lea.hbm %s2, %s168
          %s171 = sshll.u32 %s169, 4
          %s172 = int_to_ptr.hbm [resolvable:$true] %s171
          %s173 = sshll.u32 [#allocation7], 4
          %s174 = int_to_ptr.vmem [resolvable:$true] %s173
          %176 = dma.hbm_to_vmem [thread:$0]  %s172, 128, %s174, [#allocation6]
        $region24: #{tpu_custom_call.1} parent=11 // pred_fallthru
          _
      $region12: #{tpu_custom_call.1} parent=5 // pred_fallthru
        _
      %p177 = scmp.lt.s32.totalorder %s14, 2
      // Predicated region
      $region25: #{tpu_custom_call.1} parent=5 // pred_check
        %p178 = pneg %p177
      $region26: #{tpu_custom_call.1} parent=5 // pred_check_branch
        %180 = sbr.rel (%p178) target = $region28
      $region27: #{tpu_custom_call.1} parent=5 // pred_region
        _
      $region28: #{tpu_custom_call.1} parent=5 // pred_fallthru
        _
      %p181 = scmp.le.s32.totalorder 1, %s14
      %p182 = scmp.lt.s32.totalorder %s14, 3
      %p183 = pnand %p181, %p182
      %p184 = pneg %p183
      // Predicated region
      $region29: #{tpu_custom_call.1} parent=5 // pred_check
        _
      $region30: #{tpu_custom_call.1} parent=5 // pred_check_branch
        %186 = sbr.rel (%p183) target = $region32
      $region31: #{tpu_custom_call.1} parent=5 // pred_region
        %s187 = ssub.s32 %s14, 1
        // Predicated region
        $region33: #{tpu_custom_call.1} parent=31 // pred_check
          %p188 = pneg %p47
        $region34: #{tpu_custom_call.1} parent=31 // pred_check_branch
          %190 = sbr.rel (%p188) target = $region36
        $region35: #{tpu_custom_call.1} parent=31 // pred_region
          %192 = dma.done [#allocation3], 32
        $region36: #{tpu_custom_call.1} parent=31 // pred_fallthru
          _
        // Predicated region
        $region37: #{tpu_custom_call.1} parent=31 // pred_check
          %p193 = pneg %p68
        $region38: #{tpu_custom_call.1} parent=31 // pred_check_branch
          %195 = sbr.rel (%p193) target = $region40
        $region39: #{tpu_custom_call.1} parent=31 // pred_region
          %197 = dma.done [#allocation6], 1024
        $region40: #{tpu_custom_call.1} parent=31 // pred_fallthru
          _
        // Predicated region
        $region41: #{tpu_custom_call.1} parent=31 // pred_check
          %p198 = pneg %p94
        $region42: #{tpu_custom_call.1} parent=31 // pred_check_branch
          %200 = sbr.rel (%p198) target = $region44
        $region43: #{tpu_custom_call.1} parent=31 // pred_region
          %202 = dma.done [#allocation6], 128
        $region44: #{tpu_custom_call.1} parent=31 // pred_fallthru
          _
        %p203 = pneg %p47
        %p204 = pneg %p44
        %p205 = pneg %p68
        %p206 = pneg %p65
        %p207 = pneg %p94
        %p208 = pneg %p91
        %p209 = pneg %p122
        %p210 = pneg %p119
        %s211 = sand.u32 %s109, 1
        %s212 = scalar_lea.sflag [#allocation4], %s211
        %s213 = sand.u32 %s109, 1
        %s214 = smul.addr %s213, 8
        %s215 = scalar_lea.vmem [#allocation8], %s214
        %s216 = sadd.s32 %s24, %s23
        %s217 = scalar_lea.vmem [#allocation2], %s216
        %v218 = vld [vmem:[%s217] sm:$0x1]
        %v219 = vperm.slane %v218, 0
        %v220 = vlaneseq
        %v221 = vshrl.u32 %v220, 7
        %223 = vset.pattern.permute.xlu0 %v221
        %224 = vperm.xlu0 %223, %v219
        %v225 = vpop.permute.xlu0 %224
        %v226 = vlaneseq
        %v227 = vand.u32 %v226, 127
        %vm228 = vcmp.eq.s32.totalorder %v225, %v227
        %v229 = vsel %vm228, 1, 0
        %v230 = vcvt.s32.f32 %v229
        %v231 = vld [vmem:[#allocation5] sm:$0xff]
        %v232 = vld [vmem:[#allocation5 + $0x8] sm:$0xff]
        %v233 = vld [vmem:[#allocation5 + $0x10] sm:$0xff]
        %v234 = vld [vmem:[#allocation5 + $0x18] sm:$0xff]
        %v235 = vld [vmem:[#allocation5 + $0x20] sm:$0xff]
        %v236 = vld [vmem:[#allocation5 + $0x28] sm:$0xff]
        %v237 = vld [vmem:[#allocation5 + $0x30] sm:$0xff]
        %v238 = vld [vmem:[#allocation5 + $0x38] sm:$0xff]
        %v239 = vld [vmem:[#allocation7] sm:$0xff]
        %vm240 = vcmask 523264
        %v242 = vsel %vm240, %v230, 0
        %244 = vmatpush.msra.mxu0 0.0
        %245 = vmatpush.msra.mxu0 0.0
        %246 = vmatpush.msra.mxu0 0.0
        %247 = vmatpush.msra.mxu0 0.0
        %248 = vmatpush.msra.mxu0 0.0
        %249 = vmatpush.msra.mxu0 0.0
        %250 = vmatpush.msra.mxu0 0.0
        %251 = vmatpush.msra.mxu0 0.0
        %252 = vmatpush.msra.mxu0 %v238
        %253 = vmatpush.msra.mxu0 %v237
        %254 = vmatpush.msra.mxu0 %v236
        %255 = vmatpush.msra.mxu0 %v235
        %256 = vmatpush.msra.mxu0 %v234
        %257 = vmatpush.msra.mxu0 %v233
        %258 = vmatpush.msra.mxu0 %v232
        %259 = vmatpush.msra.mxu0 %v231
        %260 = vmatmul.f32.gmra.mxu0 %v242
        %v261 = vpop.f32.mrf.mxu0
        %v262 = vadd.f32 %v239, %v261
        %263 = vdwg.mxu0
        %264 = vst [vmem:[%s215] sm:$0xff] %v262
        %s265 = sand.u32 %s109, 1
        %s266 = scalar_lea.sflag [#allocation4], %s265
        %s267 = sand.u32 %s109, 1
        %s268 = smul.addr %s267, 8
        %s269 = scalar_lea.vmem [#allocation8], %s268
        // Predicated region
        $region45: #{tpu_custom_call.1} parent=31 // pred_check
          %p270 = pneg %p119
        $region46: #{tpu_custom_call.1} parent=31 // pred_check_branch
          %272 = sbr.rel (%p270) target = $region48
        $region47: #{tpu_custom_call.1} parent=31 // pred_region
          %274 = vsyncadd %s266, 0
          %s275 = sadd.s32 %s23, %s24
          %s276 = smul.addr %s275, 8
          %s277 = scalar_lea.hbm %s3, %s276
          %s279 = sshll.u32 %s269, 4
          %s280 = int_to_ptr.vmem [resolvable:$true] %s279
          %s281 = sshll.u32 %s277, 4
          %s282 = int_to_ptr.hbm [resolvable:$true] %s281
          %284 = dma.vmem_to_hbm [thread:$0]  %s280, 128, %s282, %s266
        $region48: #{tpu_custom_call.1} parent=31 // pred_fallthru
          _
      $region32: #{tpu_custom_call.1} parent=5 // pred_fallthru
        _
      %p285 = scmp.le.s32.totalorder 2, %s14
      // Predicated region
      $region49: #{tpu_custom_call.1} parent=5 // pred_check
        %p286 = pneg %p285
      $region50: #{tpu_custom_call.1} parent=5 // pred_check_branch
        %288 = sbr.rel (%p286) target = $region52
      $region51: #{tpu_custom_call.1} parent=5 // pred_region
        %s289 = ssub.s32 %s14, 2
        // Predicated region
        $region53: #{tpu_custom_call.1} parent=51 // pred_check
          %p290 = pneg %p125
        $region54: #{tpu_custom_call.1} parent=51 // pred_check_branch
          %292 = sbr.rel (%p290) target = $region56
        $region55: #{tpu_custom_call.1} parent=51 // pred_region
          %s293 = sand.u32 %s110, 1
          %s294 = scalar_lea.sflag [#allocation4], %s293
          %s295 = sand.u32 %s110, 1
          %s296 = smul.addr %s295, 8
          %s297 = scalar_lea.vmem [#allocation8], %s296
          %299 = dma.done %s294, 128
        $region56: #{tpu_custom_call.1} parent=51 // pred_fallthru
          _
      $region52: #{tpu_custom_call.1} parent=5 // pred_fallthru
        _
    $region6: #{tpu_custom_call.1} parent=1 // loop_footer
      %s18 = sadd.s32 1, %s14
    $region7: #{tpu_custom_call.1} parent=1 // loop_footer_branch
      %13 = sbr.rel target = $region3
    $region8: #{tpu_custom_call.1} parent=1 // loop_exit
      _
    %300 = vsyncpa [#allocation3], 1
    %s301 = scalar_lea.sflag [#allocation3], 1
    %302 = vsyncpa %s301, 1
    %303 = vsyncpa [#allocation6], 1
    %304 = vsyncpa [#allocation4], 1
    %s305 = scalar_lea.sflag [#allocation4], 1
    %306 = vsyncpa %s305, 1

// kernel: tpu_custom_call.1
$region0: #{tpu_custom_call.1}
  #allocation0 [shape = 'u32[]', space=smem, size = 0x4, offset = 0x4, fixed_abs, tag = 'smem constant byte address 0x4 - core index']
  #allocation1 [shape = 'u32[72,128]{1,0:T(1,128)}', space=vmem, size = 0x9000, scoped, tag = 'internal scratch']
  %s0 = inlined_call_operand.hbm [shape: s32[2,8], index: 0, kind: input, shape index: {}]
  %s1 = inlined_call_operand.hbm [shape: f32[64,128], index: 1, kind: input, shape index: {}]
  %s2 = inlined_call_operand.hbm [shape: f32[8,128], index: 2, kind: input, shape index: {}]
  %s3 = inlined_call_operand.hbm [shape: f32[2,8,128], index: 3, kind: output, shape index: {}]
  %s4 = sld [smem:[#allocation0]]
  $region57: #{tpu_custom_call.1} parent=0
    _
  %s6 = ssub.s32 1, %s4
  %s7 = scalar_select 0, %s6, %s4
  $region1: #{tpu_custom_call.1} parent=0
    #allocation2 [shape = 'u8[1024]{0}', space=vmem, size = 0x400, scoped, tag = 'input window, operand 0, single buffered']
    #allocation3 [shape = 's32[2]{0}', space=sflag, size = 0x8, scoped, tag = 'scoped memory for tpu_custom_call.1']
    #allocation4 [shape = 's32[2]{0}', space=sflag, size = 0x8, scoped, tag = 'scoped memory for tpu_custom_call.1']
    #allocation5 [shape = 'u8[32768]{0}', space=vmem, size = 0x8000, scoped, tag = 'input window, operand 1, single buffered']
    #allocation6 [shape = 's32[1]{0}', space=sflag, size = 0x4, scoped, tag = 'scoped memory for tpu_custom_call.1']
    #allocation7 [shape = 'u8[4096]{0}', space=vmem, size = 0x1000, scoped, tag = 'input window, operand 2, single buffered']
    #allocation8 [shape = 'u8[8192]{0}', space=vmem, size = 0x2000, scoped, tag = 'output window, operand 0']
    %8 = vsyncpa [#allocation3], 0
    %9 = vsyncpa [#allocation6], 0
    %10 = vsyncpa [#allocation4], 0
    %s11 = scalar_lea.sflag [#allocation4], 1
    %12 = vsyncpa %s11, 0
    loop: start=0, step=1, limit=4
    $region2: #{tpu_custom_call.1} parent=1 // loop_pre_header
      _
    $region3: #{tpu_custom_call.1} parent=1 // loop_header
      %s14 = sphi 0, %s18
      %p15 = scmp.ge.s32.totalorder %s14, 4
      %s21 = sphi 0, %s33
      %s22 = sphi 0, %s29
      %s23 = sphi 0, %s21
      %s24 = sphi 0, %s22
      %s25 = sphi 0, %s23
      %s26 = sphi 0, %s24
      %s34 = sphi 0, %s34
      %s36 = sphi 0, %s34
      %s37 = sphi 0, %s36
      %s51 = sphi 0, %s37
      %s55 = sphi 0, %s55
      %s57 = sphi 0, %s55
      %s58 = sphi 0, %s57
      %s72 = sphi 0, %s58
      %s78 = sphi 0, %s80
      %s81 = sphi 0, %s78
      %s82 = sphi 0, %s81
      %s98 = sphi 0, %s82
      %s106 = sphi 0, %s108
      %s109 = sphi 0, %s106
      %s110 = sphi 0, %s109
      %s126 = sphi 0, %s110
    $region4: #{tpu_custom_call.1} parent=1 // loop_header_branch
      %17 = sbr.rel (%p15) target = $region8
    $region5: #{tpu_custom_call.1} parent=1 // loop_body
      %s19 = ssub.s32 %s14, 1
      %s20 = ssub.s32 %s14, 2
      %s27 = sadd.s32 1, %s22
      %p28 = scmp.ge.s32.totalorder %s27, 2
      %s29 = scalar_select %p28, 0, %s27
      %s30 = sadd.s32 1, %s21
      %s31 = scalar_select %p28, %s30, %s21
      %p32 = scmp.ge.s32.totalorder %s31, 1
      %s33 = scalar_select %p32, 0, %s31
      %s35 = sadd.s32 %s34, 1
      %p38 = scmp.eq.s32.totalorder %s14, 1
      %p39 = scmp.ne.s32.totalorder %s34, %s36
      %p40 = scmp.eq.s32.totalorder %s14, 0
      %p41 = por %p39, %p40
      %p42 = scmp.ne.s32.totalorder %s34, %s36
      %p43 = scmp.eq.s32.totalorder %s19, 1
      %p44 = por %p42, %p43
      %p45 = scmp.ne.s32.totalorder %s36, %s37
      %p46 = scmp.eq.s32.totalorder %s19, 0
      %p47 = por %p45, %p46
      %p48 = scmp.ne.s32.totalorder %s36, %s37
      %p49 = scmp.eq.s32.totalorder %s20, 1
      %p50 = por %p48, %p49
      %p52 = scmp.ne.s32.totalorder %s37, %s51
      %p53 = scmp.eq.s32.totalorder %s20, 0
      %p54 = por %p52, %p53
      %s56 = sadd.s32 %s55, 1
      %p59 = scmp.eq.s32.totalorder %s14, 1
      %p60 = scmp.ne.s32.totalorder %s55, %s57
      %p61 = scmp.eq.s32.totalorder %s14, 0
      %p62 = por %p60, %p61
      %p63 = scmp.ne.s32.totalorder %s55, %s57
      %p64 = scmp.eq.s32.totalorder %s19, 1
      %p65 = por %p63, %p64
      %p66 = scmp.ne.s32.totalorder %s57, %s58
      %p67 = scmp.eq.s32.totalorder %s19, 0
      %p68 = por %p66, %p67
      %p69 = scmp.ne.s32.totalorder %s57, %s58
      %p70 = scmp.eq.s32.totalorder %s20, 1
      %p71 = por %p69, %p70
      %p73 = scmp.ne.s32.totalorder %s58, %s72
      %p74 = scmp.eq.s32.totalorder %s20, 0
      %p75 = por %p73, %p74
      %s76 = ssub.s32 %s21, %s33
      %p77 = scmp.eq.s32.totalorder %s76, 0
      %s79 = sadd.s32 %s78, 1
      %s80 = scalar_select %p77, %s78, %s79
      %p83 = pneg %p77
      %p84 = scmp.eq.s32.totalorder %s14, 1
      %p85 = por %p83, %p84
      %p86 = scmp.ne.s32.totalorder %s78, %s81
      %p87 = scmp.eq.s32.totalorder %s14, 0
      %p88 = por %p86, %p87
      %p89 = scmp.ne.s32.totalorder %s78, %s81
      %p90 = scmp.eq.s32.totalorder %s19, 1
      %p91 = por %p89, %p90
      %p92 = scmp.ne.s32.totalorder %s81, %s82
      %p93 = scmp.eq.s32.totalorder %s19, 0
      %p94 = por %p92, %p93
      %p95 = scmp.ne.s32.totalorder %s81, %s82
      %p96 = scmp.eq.s32.totalorder %s20, 1
      %p97 = por %p95, %p96
      %p99 = scmp.ne.s32.totalorder %s82, %s98
      %p100 = scmp.eq.s32.totalorder %s20, 0
      %p101 = por %p99, %p100
      %s102 = ssub.s32 %s22, %s29
      %s103 = ssub.s32 %s21, %s33
      %s104 = sor.u32 %s102, %s103
      %p105 = scmp.eq.s32.totalorder %s104, 0
      %s107 = sadd.s32 %s106, 1
      %s108 = scalar_select %p105, %s106, %s107
      %p111 = pneg %p105
      %p112 = scmp.eq.s32.totalorder %s14, 1
      %p113 = por %p111, %p112
      %p114 = scmp.ne.s32.totalorder %s106, %s109
      %p115 = scmp.eq.s32.totalorder %s14, 0
      %p116 = por %p114, %p115
      %p117 = scmp.ne.s32.totalorder %s106, %s109
      %p118 = scmp.eq.s32.totalorder %s19, 1
      %p119 = por %p117, %p118
      %p120 = scmp.ne.s32.totalorder %s109, %s110
      %p121 = scmp.eq.s32.totalorder %s19, 0
      %p122 = por %p120, %p121
      %p123 = scmp.ne.s32.totalorder %s109, %s110
      %p124 = scmp.eq.s32.totalorder %s20, 1
      %p125 = por %p123, %p124
      %p127 = scmp.ne.s32.totalorder %s110, %s126
      %p128 = scmp.eq.s32.totalorder %s20, 0
      %p129 = por %p127, %p128
      %p130 = scmp.le.s32.totalorder 1, %s14
      %p131 = scmp.lt.s32.totalorder %s14, 3
      %p132 = pnand %p130, %p131
      %p133 = pneg %p132
      // Predicated region
      $region9: #{tpu_custom_call.1} parent=5 // pred_check
        _
      $region10: #{tpu_custom_call.1} parent=5 // pred_check_branch
        %135 = sbr.rel (%p132) target = $region12
      $region11: #{tpu_custom_call.1} parent=5 // pred_region
        %s136 = ssub.s32 %s14, 1
        // Predicated region
        $region13: #{tpu_custom_call.1} parent=11 // pred_check
          %p137 = pneg %p47
        $region14: #{tpu_custom_call.1} parent=11 // pred_check_branch
          %139 = sbr.rel (%p137) target = $region16
        $region15: #{tpu_custom_call.1} parent=11 // pred_region
          %141 = vsyncadd [#allocation3], 0
          %s143 = sshll.u32 %s0, 4
          %s144 = int_to_ptr.hbm [resolvable:$true] %s143
          %s145 = sshll.u32 [#allocation2], 4
          %s146 = int_to_ptr.vmem [resolvable:$true] %s145
          %148 = dma.hbm_to_vmem [thread:$0]  %s144, 32, %s146, [#allocation3]
        $region16: #{tpu_custom_call.1} parent=11 // pred_fallthru
          _
        // Predicated region
        $region17: #{tpu_custom_call.1} parent=11 // pred_check
          %p149 = pneg %p68
        $region18: #{tpu_custom_call.1} parent=11 // pred_check_branch
          %151 = sbr.rel (%p149) target = $region20
        $region19: #{tpu_custom_call.1} parent=11 // pred_region
          %153 = vsyncadd [#allocation6], 0
          %s154 = sshll.u32 %s1, 4
          %s155 = int_to_ptr.hbm [resolvable:$true] %s154
          %s156 = sshll.u32 [#allocation5], 4
          %s157 = int_to_ptr.vmem [resolvable:$true] %s156
          %162 = dma.hbm_to_vmem [thread:$0]  %s155, 1024, %s157, [#allocation6], 128, 128, 8
        $region20: #{tpu_custom_call.1} parent=11 // pred_fallthru
          _
        // Predicated region
        $region21: #{tpu_custom_call.1} parent=11 // pred_check
          %p163 = pneg %p94
        $region22: #{tpu_custom_call.1} parent=11 // pred_check_branch
          %165 = sbr.rel (%p163) target = $region24
        $region23: #{tpu_custom_call.1} parent=11 // pred_region
          %167 = vsyncadd [#allocation6], 0
          %s168 = smul.addr %s23, 8
          %s169 = scalar_lea.hbm %s2, %s168
          %s171 = sshll.u32 %s169, 4
          %s172 = int_to_ptr.hbm [resolvable:$true] %s171
          %s173 = sshll.u32 [#allocation7], 4
          %s174 = int_to_ptr.vmem [resolvable:$true] %s173
          %176 = dma.hbm_to_vmem [thread:$0]  %s172, 128, %s174, [#allocation6]
        $region24: #{tpu_custom_call.1} parent=11 // pred_fallthru
          _
      $region12: #{tpu_custom_call.1} parent=5 // pred_fallthru
        _
      %p177 = scmp.lt.s32.totalorder %s14, 2
      // Predicated region
      $region25: #{tpu_custom_call.1} parent=5 // pred_check
        %p178 = pneg %p177
      $region26: #{tpu_custom_call.1} parent=5 // pred_check_branch
        %180 = sbr.rel (%p178) target = $region28
      $region27: #{tpu_custom_call.1} parent=5 // pred_region
        _
      $region28: #{tpu_custom_call.1} parent=5 // pred_fallthru
        _
      %p181 = scmp.le.s32.totalorder 1, %s14
      %p182 = scmp.lt.s32.totalorder %s14, 3
      %p183 = pnand %p181, %p182
      %p184 = pneg %p183
      // Predicated region
      $region29: #{tpu_custom_call.1} parent=5 // pred_check
        _
      $region30: #{tpu_custom_call.1} parent=5 // pred_check_branch
        %186 = sbr.rel (%p183) target = $region32
      $region31: #{tpu_custom_call.1} parent=5 // pred_region
        %s187 = ssub.s32 %s14, 1
        // Predicated region
        $region33: #{tpu_custom_call.1} parent=31 // pred_check
          %p188 = pneg %p47
        $region34: #{tpu_custom_call.1} parent=31 // pred_check_branch
          %190 = sbr.rel (%p188) target = $region36
        $region35: #{tpu_custom_call.1} parent=31 // pred_region
          %192 = dma.done [#allocation3], 32
        $region36: #{tpu_custom_call.1} parent=31 // pred_fallthru
          _
        // Predicated region
        $region37: #{tpu_custom_call.1} parent=31 // pred_check
          %p193 = pneg %p68
        $region38: #{tpu_custom_call.1} parent=31 // pred_check_branch
          %195 = sbr.rel (%p193) target = $region40
        $region39: #{tpu_custom_call.1} parent=31 // pred_region
          %197 = dma.done [#allocation6], 1024
        $region40: #{tpu_custom_call.1} parent=31 // pred_fallthru
          _
        // Predicated region
        $region41: #{tpu_custom_call.1} parent=31 // pred_check
          %p198 = pneg %p94
        $region42: #{tpu_custom_call.1} parent=31 // pred_check_branch
          %200 = sbr.rel (%p198) target = $region44
        $region43: #{tpu_custom_call.1} parent=31 // pred_region
          %202 = dma.done [#allocation6], 128
        $region44: #{tpu_custom_call.1} parent=31 // pred_fallthru
          _
        %p203 = pneg %p47
        %p204 = pneg %p44
        %p205 = pneg %p68
        %p206 = pneg %p65
        %p207 = pneg %p94
        %p208 = pneg %p91
        %p209 = pneg %p122
        %p210 = pneg %p119
        %s211 = sand.u32 %s109, 1
        %s212 = scalar_lea.sflag [#allocation4], %s211
        %s213 = sand.u32 %s109, 1
        %s214 = smul.addr %s213, 8
        %s215 = scalar_lea.vmem [#allocation8], %s214
        %s216 = sadd.s32 %s24, %s23
        %s217 = scalar_lea.vmem [#allocation2], %s216
        %v218 = vld [vmem:[%s217] sm:$0x1]
        %v219 = vperm.slane %v218, 0
        %v220 = vlaneseq
        %v221 = vshrl.u32 %v220, 7
        %223 = vset.pattern.permute.xlu0 %v221
        %224 = vperm.xlu0 %223, %v219
        %v225 = vpop.permute.xlu0 %224
        %v226 = vlaneseq
        %v227 = vand.u32 %v226, 127
        %vm228 = vcmp.eq.s32.totalorder %v225, %v227
        %v229 = vsel %vm228, 1, 0
        %v230 = vcvt.s32.f32 %v229
        %v231 = vld [vmem:[#allocation5] sm:$0xff]
        %v232 = vld [vmem:[#allocation5 + $0x8] sm:$0xff]
        %v233 = vld [vmem:[#allocation5 + $0x10] sm:$0xff]
        %v234 = vld [vmem:[#allocation5 + $0x18] sm:$0xff]
        %v235 = vld [vmem:[#allocation5 + $0x20] sm:$0xff]
        %v236 = vld [vmem:[#allocation5 + $0x28] sm:$0xff]
        %v237 = vld [vmem:[#allocation5 + $0x30] sm:$0xff]
        %v238 = vld [vmem:[#allocation5 + $0x38] sm:$0xff]
        %v239 = vld [vmem:[#allocation7] sm:$0xff]
        %vm240 = vcmask 523264
        %v242 = vsel %vm240, %v230, 0
        %244 = vmatpush.msra.mxu0 0.0
        %245 = vmatpush.msra.mxu0 0.0
        %246 = vmatpush.msra.mxu0 0.0
        %247 = vmatpush.msra.mxu0 0.0
        %248 = vmatpush.msra.mxu0 0.0
        %249 = vmatpush.msra.mxu0 0.0
        %250 = vmatpush.msra.mxu0 0.0
        %251 = vmatpush.msra.mxu0 0.0
        %252 = vmatpush.msra.mxu0 %v238
        %253 = vmatpush.msra.mxu0 %v237
        %254 = vmatpush.msra.mxu0 %v236
        %255 = vmatpush.msra.mxu0 %v235
        %256 = vmatpush.msra.mxu0 %v234
        %257 = vmatpush.msra.mxu0 %v233
        %258 = vmatpush.msra.mxu0 %v232
        %259 = vmatpush.msra.mxu0 %v231
        %260 = vmatmul.f32.gmra.mxu0 %v242
        %v261 = vpop.f32.mrf.mxu0
        %v262 = vadd.f32 %v239, %v261
        %263 = vdwg.mxu0
        %264 = vst [vmem:[%s215] sm:$0xff] %v262
        %s265 = sand.u32 %s109, 1
        %s266 = scalar_lea.sflag [#allocation4], %s265
        %s267 = sand.u32 %s109, 1
        %s268 = smul.addr %s267, 8
        %s269 = scalar_lea.vmem [#allocation8], %s268
        // Predicated region
        $region45: #{tpu_custom_call.1} parent=31 // pred_check
          %p270 = pneg %p119
        $region46: #{tpu_custom_call.1} parent=31 // pred_check_branch
          %272 = sbr.rel (%p270) target = $region48
        $region47: #{tpu_custom_call.1} parent=31 // pred_region
          %274 = vsyncadd %s266, 0
          %s275 = sadd.s32 %s23, %s24
          %s276 = smul.addr %s275, 8
          %s277 = scalar_lea.hbm %s3, %s276
          %s279 = sshll.u32 %s269, 4
          %s280 = int_to_ptr.vmem [resolvable:$true] %s279
          %s281 = sshll.u32 %s277, 4
          %s282 = int_to_ptr.hbm [resolvable:$true] %s281
          %284 = dma.vmem_to_hbm [thread:$0]  %s280, 128, %s282, %s266
        $region48: #{tpu_custom_call.1} parent=31 // pred_fallthru
          _
      $region32: #{tpu_custom_call.1} parent=5 // pred_fallthru
        _
      %p285 = scmp.le.s32.totalorder 2, %s14
      // Predicated region
      $region49: #{tpu_custom_call.1} parent=5 // pred_check
        %p286 = pneg %p285
      $region50: #{tpu_custom_call.1} parent=5 // pred_check_branch
        %288 = sbr.rel (%p286) target = $region52
      $region51: #{tpu_custom_call.1} parent=5 // pred_region
        %s289 = ssub.s32 %s14, 2
        // Predicated region
        $region53: #{tpu_custom_call.1} parent=51 // pred_check
          %p290 = pneg %p125
        $region54: #{tpu_custom_call.1} parent=51 // pred_check_branch
          %292 = sbr.rel (%p290) target = $region56
        $region55: #{tpu_custom_call.1} parent=51 // pred_region
          %s293 = sand.u32 %s110, 1
          %s294 = scalar_lea.sflag [#allocation4], %s293
          %s295 = sand.u32 %s110, 1
          %s296 = smul.addr %s295, 8
          %s297 = scalar_lea.vmem [#allocation8], %s296
          %299 = dma.done %s294, 128
        $region56: #{tpu_custom_call.1} parent=51 // pred_fallthru
          _
      $region52: #{tpu_custom_call.1} parent=5 // pred_fallthru
        _
    $region6: #{tpu_custom_call.1} parent=1 // loop_footer
      %s18 = sadd.s32 1, %s14
    $region7: #{tpu_custom_call.1} parent=1 // loop_footer_branch
      %13 = sbr.rel target = $region3
    $region8: #{tpu_custom_call.1} parent=1 // loop_exit
      _
    %300 = vsyncpa [#allocation3], 1
    %s301 = scalar_lea.sflag [#allocation3], 1
    %302 = vsyncpa %s301, 1
    %303 = vsyncpa [#allocation6], 1
    %304 = vsyncpa [#allocation4], 1
    %s305 = scalar_lea.sflag [#allocation4], 1
    %306 = vsyncpa %s305, 1

// kernel: tpu_custom_call.1
$region0: #{tpu_custom_call.1}
  #allocation0 [shape = 'u32[]', space=smem, size = 0x4, offset = 0x4, fixed_abs, tag = 'smem constant byte address 0x4 - core index']
  #allocation1 [shape = 'u32[72,128]{1,0:T(1,128)}', space=vmem, size = 0x9000, scoped, tag = 'internal scratch']
  #allocation2 [shape = 'f32[8,128]{1,0:T(8,128)}', space=vmem, size = 0x1000, scoped, tag = 'scratch operand']
  #allocation3 [shape = 's32[8]{0}', space=sflag, size = 0x20, scoped, tag = 'scratch operand']
  #allocation4 [shape = 's32[1]{0}', space=sflag, size = 0x4, scoped, tag = 'scoped memory for tpu_custom_call.1']
  #allocation5 [shape = 'u8[512]{0}', space=smem, size = 0x200, scoped, tag = 'prefetched SMEM operand 0']
  #allocation10 [shape = 's32[]', space=sflag, size = 0x4, offset = 0, fixed_abs, tag = 'sflag constant byte address 0x0 - dummy sync flag']
  #allocation11 [shape = 's32[]', space=sflag, size = 0x4, offset = 0, fixed_abs, tag = 'sflag constant byte address 0x0 - dummy sync flag']
  #allocation12 [shape = 'u32[]', space=smem, size = 0x4, offset = 0x44, fixed_abs, tag = 'smem constant byte address 0x44 - assertion arg 0']
  #allocation13 [shape = 'u32[]', space=smem, size = 0x4, offset = 0x48, fixed_abs, tag = 'smem constant byte address 0x48 - assertion arg 1']
  #allocation14 [shape = 's32[]', space=sflag, size = 0x4, offset = 0, fixed_abs, tag = 'sflag constant byte address 0x0 - dummy sync flag']
  #allocation15 [shape = 's32[]', space=sflag, size = 0x4, offset = 0, fixed_abs, tag = 'sflag constant byte address 0x0 - dummy sync flag']
  #allocation16 [shape = 's32[]', space=sflag, size = 0x4, offset = 0, fixed_abs, tag = 'sflag constant byte address 0x0 - dummy sync flag']
  #allocation17 [shape = 's32[]', space=sflag, size = 0x4, offset = 0, fixed_abs, tag = 'sflag constant byte address 0x0 - dummy sync flag']
  #allocation18 [shape = 's32[]', space=sflag, size = 0x4, offset = 0, fixed_abs, tag = 'sflag constant byte address 0x0 - dummy sync flag']
  #allocation19 [shape = 's32[]', space=sflag, size = 0x4, offset = 0, fixed_abs, tag = 'sflag constant byte address 0x0 - dummy sync flag']
  #allocation20 [shape = 's32[]', space=sflag, size = 0x4, offset = 0, fixed_abs, tag = 'sflag constant byte address 0x0 - dummy sync flag']
  #allocation21 [shape = 's32[]', space=sflag, size = 0x4, offset = 0, fixed_abs, tag = 'sflag constant byte address 0x0 - dummy sync flag']
  #allocation22 [shape = 's32[]', space=sflag, size = 0x4, offset = 0, fixed_abs, tag = 'sflag constant byte address 0x0 - dummy sync flag']
  #allocation23 [shape = 's32[]', space=sflag, size = 0x4, offset = 0, fixed_abs, tag = 'sflag constant byte address 0x0 - dummy sync flag']
  #allocation24 [shape = 's32[]', space=sflag, size = 0x4, offset = 0, fixed_abs, tag = 'sflag constant byte address 0x0 - dummy sync flag']
  #allocation25 [shape = 's32[]', space=sflag, size = 0x4, offset = 0, fixed_abs, tag = 'sflag constant byte address 0x0 - dummy sync flag']
  #allocation26 [shape = 's32[]', space=sflag, size = 0x4, offset = 0, fixed_abs, tag = 'sflag constant byte address 0x0 - dummy sync flag']
  #allocation27 [shape = 's32[]', space=sflag, size = 0x4, offset = 0, fixed_abs, tag = 'sflag constant byte address 0x0 - dummy sync flag']
  #allocation28 [shape = 's32[]', space=sflag, size = 0x4, offset = 0, fixed_abs, tag = 'sflag constant byte address 0x0 - dummy sync flag']
  #allocation29 [shape = 's32[]', space=sflag, size = 0x4, offset = 0, fixed_abs, tag = 'sflag constant byte address 0x0 - dummy sync flag']
  %s0 = inlined_call_operand.hbm [shape: s32[16], index: 0, kind: input, shape index: {}]
  %s1 = inlined_call_operand.hbm [shape: f32[64,128], index: 1, kind: input, shape index: {}]
  %s2 = inlined_call_operand.hbm [shape: f32[8,128], index: 2, kind: input, shape index: {}]
  %s3 = inlined_call_operand.hbm [shape: f32[2,8,128], index: 3, kind: output, shape index: {}]
  %s4 = sld [smem:[#allocation0]]
  $region88: #{tpu_custom_call.1} parent=0
    _
  %s6 = ssub.s32 1, %s4
  %s7 = scalar_select 0, %s6, %s4
  %s9 = sshll.u32 %s0, 4
  %s10 = int_to_ptr.hbm [resolvable:$true] %s9
  %12 = dma.hbm_to_smem %s10, 16, [#allocation5], [#allocation4]
  %14 = dma.done [#allocation4], 16
  %15 = sfence
  $region1: #{tpu_custom_call.1} parent=0
    #allocation6 [shape = 'u8[4096]{0}', space=vmem, size = 0x1000, scoped, tag = 'input window, operand 2, single buffered']
    #allocation7 [shape = 's32[2]{0}', space=sflag, size = 0x8, scoped, tag = 'scoped memory for tpu_custom_call.1']
    #allocation8 [shape = 's32[2]{0}', space=sflag, size = 0x8, scoped, tag = 'scoped memory for tpu_custom_call.1']
    #allocation9 [shape = 'u8[8192]{0}', space=vmem, size = 0x2000, scoped, tag = 'output window, operand 0']
    %16 = vsyncpa [#allocation7], 0
    %17 = vsyncpa [#allocation8], 0
    %s18 = scalar_lea.sflag [#allocation8], 1
    %19 = vsyncpa %s18, 0
    loop: start=0, step=1, limit=4
    $region2: #{tpu_custom_call.1} parent=1 // loop_pre_header
      _
    $region3: #{tpu_custom_call.1} parent=1 // loop_header
      %s21 = sphi 0, %s25
      %p22 = scmp.ge.s32.totalorder %s21, 4
      %s28 = sphi 0, %s40
      %s29 = sphi 0, %s36
      %s30 = sphi 0, %s28
      %s31 = sphi 0, %s29
      %s32 = sphi 0, %s30
      %s33 = sphi 0, %s31
      %s43 = sphi 0, %s45
      %s46 = sphi 0, %s43
      %s47 = sphi 0, %s46
      %s63 = sphi 0, %s47
      %s71 = sphi 0, %s73
      %s74 = sphi 0, %s71
      %s75 = sphi 0, %s74
      %s91 = sphi 0, %s75
    $region4: #{tpu_custom_call.1} parent=1 // loop_header_branch
      %24 = sbr.rel (%p22) target = $region8
    $region5: #{tpu_custom_call.1} parent=1 // loop_body
      %s26 = ssub.s32 %s21, 1
      %s27 = ssub.s32 %s21, 2
      %s34 = sadd.s32 1, %s29
      %p35 = scmp.ge.s32.totalorder %s34, 2
      %s36 = scalar_select %p35, 0, %s34
      %s37 = sadd.s32 1, %s28
      %s38 = scalar_select %p35, %s37, %s28
      %p39 = scmp.ge.s32.totalorder %s38, 1
      %s40 = scalar_select %p39, 0, %s38
      %s41 = ssub.s32 %s28, %s40
      %p42 = scmp.eq.s32.totalorder %s41, 0
      %s44 = sadd.s32 %s43, 1
      %s45 = scalar_select %p42, %s43, %s44
      %p48 = pneg %p42
      %p49 = scmp.eq.s32.totalorder %s21, 1
      %p50 = por %p48, %p49
      %p51 = scmp.ne.s32.totalorder %s43, %s46
      %p52 = scmp.eq.s32.totalorder %s21, 0
      %p53 = por %p51, %p52
      %p54 = scmp.ne.s32.totalorder %s43, %s46
      %p55 = scmp.eq.s32.totalorder %s26, 1
      %p56 = por %p54, %p55
      %p57 = scmp.ne.s32.totalorder %s46, %s47
      %p58 = scmp.eq.s32.totalorder %s26, 0
      %p59 = por %p57, %p58
      %p60 = scmp.ne.s32.totalorder %s46, %s47
      %p61 = scmp.eq.s32.totalorder %s27, 1
      %p62 = por %p60, %p61
      %p64 = scmp.ne.s32.totalorder %s47, %s63
      %p65 = scmp.eq.s32.totalorder %s27, 0
      %p66 = por %p64, %p65
      %s67 = ssub.s32 %s29, %s36
      %s68 = ssub.s32 %s28, %s40
      %s69 = sor.u32 %s67, %s68
      %p70 = scmp.eq.s32.totalorder %s69, 0
      %s72 = sadd.s32 %s71, 1
      %s73 = scalar_select %p70, %s71, %s72
      %p76 = pneg %p70
      %p77 = scmp.eq.s32.totalorder %s21, 1
      %p78 = por %p76, %p77
      %p79 = scmp.ne.s32.totalorder %s71, %s74
      %p80 = scmp.eq.s32.totalorder %s21, 0
      %p81 = por %p79, %p80
      %p82 = scmp.ne.s32.totalorder %s71, %s74
      %p83 = scmp.eq.s32.totalorder %s26, 1
      %p84 = por %p82, %p83
      %p85 = scmp.ne.s32.totalorder %s74, %s75
      %p86 = scmp.eq.s32.totalorder %s26, 0
      %p87 = por %p85, %p86
      %p88 = scmp.ne.s32.totalorder %s74, %s75
      %p89 = scmp.eq.s32.totalorder %s27, 1
      %p90 = por %p88, %p89
      %p92 = scmp.ne.s32.totalorder %s75, %s91
      %p93 = scmp.eq.s32.totalorder %s27, 0
      %p94 = por %p92, %p93
      %p95 = scmp.le.s32.totalorder 1, %s21
      %p96 = scmp.lt.s32.totalorder %s21, 3
      %p97 = pnand %p95, %p96
      %p98 = pneg %p97
      // Predicated region
      $region9: #{tpu_custom_call.1} parent=5 // pred_check
        _
      $region10: #{tpu_custom_call.1} parent=5 // pred_check_branch
        %100 = sbr.rel (%p97) target = $region12
      $region11: #{tpu_custom_call.1} parent=5 // pred_region
        %s101 = ssub.s32 %s21, 1
        // Predicated region
        $region13: #{tpu_custom_call.1} parent=11 // pred_check
          %p102 = pneg %p59
        $region14: #{tpu_custom_call.1} parent=11 // pred_check_branch
          %104 = sbr.rel (%p102) target = $region16
        $region15: #{tpu_custom_call.1} parent=11 // pred_region
          %106 = vsyncadd [#allocation7], 0
          %s107 = smul.addr %s30, 8
          %s108 = scalar_lea.hbm %s2, %s107
          %s110 = sshll.u32 %s108, 4
          %s111 = int_to_ptr.hbm [resolvable:$true] %s110
          %s112 = sshll.u32 [#allocation6], 4
          %s113 = int_to_ptr.vmem [resolvable:$true] %s112
          %115 = dma.hbm_to_vmem [thread:$0]  %s111, 128, %s113, [#allocation7]
        $region16: #{tpu_custom_call.1} parent=11 // pred_fallthru
          _
      $region12: #{tpu_custom_call.1} parent=5 // pred_fallthru
        _
      %p116 = scmp.lt.s32.totalorder %s21, 2
      // Predicated region
      $region17: #{tpu_custom_call.1} parent=5 // pred_check
        %p117 = pneg %p116
      $region18: #{tpu_custom_call.1} parent=5 // pred_check_branch
        %119 = sbr.rel (%p117) target = $region20
      $region19: #{tpu_custom_call.1} parent=5 // pred_region
        _
      $region20: #{tpu_custom_call.1} parent=5 // pred_fallthru
        _
      %p120 = scmp.le.s32.totalorder 1, %s21
      %p121 = scmp.lt.s32.totalorder %s21, 3
      %p122 = pnand %p120, %p121
      %p123 = pneg %p122
      // Predicated region
      $region21: #{tpu_custom_call.1} parent=5 // pred_check
        _
      $region22: #{tpu_custom_call.1} parent=5 // pred_check_branch
        %125 = sbr.rel (%p122) target = $region24
      $region23: #{tpu_custom_call.1} parent=5 // pred_region
        %s126 = ssub.s32 %s21, 1
        // Predicated region
        $region25: #{tpu_custom_call.1} parent=23 // pred_check
          %p127 = pneg %p59
        $region26: #{tpu_custom_call.1} parent=23 // pred_check_branch
          %129 = sbr.rel (%p127) target = $region28
        $region27: #{tpu_custom_call.1} parent=23 // pred_region
          %131 = dma.done [#allocation7], 128
        $region28: #{tpu_custom_call.1} parent=23 // pred_fallthru
          _
        %p132 = pneg %p59
        %p133 = pneg %p56
        %p134 = pneg %p87
        %p135 = pneg %p84
        %s136 = sand.u32 %s74, 1
        %s137 = scalar_lea.sflag [#allocation8], %s136
        %s138 = sand.u32 %s74, 1
        %s139 = smul.addr %s138, 8
        %s140 = scalar_lea.vmem [#allocation9], %s139
        %s141 = smul.u32 %s31, 8
        %s142 = smul.u32 %s30, 8
        %s143 = sadd.s32 %s141, %s142
        %s144 = sld [smem:[#allocation5 + %s143]]
        %p145 = scmp.gt.s32.totalorder %s144, 0
        %s146 = scalar_select %p145, %s144, 0
        %p147 = scmp.lt.s32.totalorder %s146, 63
        %s148 = scalar_select %p147, %s146, 63
        %s149 = scalar_lea.hbm %s1, %s148
        // Predicated region
        $region29: #{tpu_custom_call.1} parent=23 // pred_check
          _
        $region30: #{tpu_custom_call.1} parent=23 // pred_check_branch
          %151 = sbr.rel target = $region32
        $region31: #{tpu_custom_call.1} parent=23 // pred_region
          %152 = sst [smem:[#allocation12]] [#allocation11]
          %153 = sst [smem:[#allocation13]] [#allocation10]
        $region32: #{tpu_custom_call.1} parent=23 // pred_fallthru
          _
        %155 = shalt.err (0)
        %s157 = sshll.u32 %s149, 4
        %s158 = int_to_ptr.hbm [resolvable:$true] %s157
        %s159 = sshll.u32 [#allocation2], 4
        %s160 = int_to_ptr.vmem [resolvable:$true] %s159
        %162 = dma.hbm_to_vmem [thread:$0]  %s158, 16, %s160, [#allocation3]
        %s163 = sadd.s32 %s143, 1
        %s164 = sld [smem:[#allocation5 + %s163]]
        %p165 = scmp.gt.s32.totalorder %s164, 0
        %s166 = scalar_select %p165, %s164, 0
        %p167 = scmp.lt.s32.totalorder %s166, 63
        %s168 = scalar_select %p167, %s166, 63
        %s169 = scalar_lea.hbm %s1, %s168
        %s170 = scalar_lea.vmem [#allocation2], 1
        %s171 = scalar_lea.sflag [#allocation3], 1
        // Predicated region
        $region33: #{tpu_custom_call.1} parent=23 // pred_check
          _
        $region34: #{tpu_custom_call.1} parent=23 // pred_check_branch
          %173 = sbr.rel target = $region36
        $region35: #{tpu_custom_call.1} parent=23 // pred_region
          %174 = sst [smem:[#allocation12]] [#allocation15]
          %175 = sst [smem:[#allocation13]] [#allocation14]
        $region36: #{tpu_custom_call.1} parent=23 // pred_fallthru
          _
        %177 = shalt.err (0)
        %s179 = sshll.u32 %s169, 4
        %s180 = int_to_ptr.hbm [resolvable:$true] %s179
        %s181 = sshll.u32 %s170, 4
        %s182 = int_to_ptr.vmem [resolvable:$true] %s181
        %184 = dma.hbm_to_vmem [thread:$0]  %s180, 16, %s182, %s171
        %s185 = sadd.s32 %s143, 2
        %s186 = sld [smem:[#allocation5 + %s185]]
        %p187 = scmp.gt.s32.totalorder %s186, 0
        %s188 = scalar_select %p187, %s186, 0
        %p189 = scmp.lt.s32.totalorder %s188, 63
        %s190 = scalar_select %p189, %s188, 63
        %s191 = scalar_lea.hbm %s1, %s190
        %s192 = scalar_lea.vmem [#allocation2], 2
        %s193 = scalar_lea.sflag [#allocation3], 2
        // Predicated region
        $region37: #{tpu_custom_call.1} parent=23 // pred_check
          _
        $region38: #{tpu_custom_call.1} parent=23 // pred_check_branch
          %195 = sbr.rel target = $region40
        $region39: #{tpu_custom_call.1} parent=23 // pred_region
          %196 = sst [smem:[#allocation12]] [#allocation17]
          %197 = sst [smem:[#allocation13]] [#allocation16]
        $region40: #{tpu_custom_call.1} parent=23 // pred_fallthru
          _
        %199 = shalt.err (0)
        %s201 = sshll.u32 %s191, 4
        %s202 = int_to_ptr.hbm [resolvable:$true] %s201
        %s203 = sshll.u32 %s192, 4
        %s204 = int_to_ptr.vmem [resolvable:$true] %s203
        %206 = dma.hbm_to_vmem [thread:$0]  %s202, 16, %s204, %s193
        %s207 = sadd.s32 %s143, 3
        %s208 = sld [smem:[#allocation5 + %s207]]
        %p209 = scmp.gt.s32.totalorder %s208, 0
        %s210 = scalar_select %p209, %s208, 0
        %p211 = scmp.lt.s32.totalorder %s210, 63
        %s212 = scalar_select %p211, %s210, 63
        %s213 = scalar_lea.hbm %s1, %s212
        %s214 = scalar_lea.vmem [#allocation2], 3
        %s215 = scalar_lea.sflag [#allocation3], 3
        // Predicated region
        $region41: #{tpu_custom_call.1} parent=23 // pred_check
          _
        $region42: #{tpu_custom_call.1} parent=23 // pred_check_branch
          %217 = sbr.rel target = $region44
        $region43: #{tpu_custom_call.1} parent=23 // pred_region
          %218 = sst [smem:[#allocation12]] [#allocation19]
          %219 = sst [smem:[#allocation13]] [#allocation18]
        $region44: #{tpu_custom_call.1} parent=23 // pred_fallthru
          _
        %221 = shalt.err (0)
        %s223 = sshll.u32 %s213, 4
        %s224 = int_to_ptr.hbm [resolvable:$true] %s223
        %s225 = sshll.u32 %s214, 4
        %s226 = int_to_ptr.vmem [resolvable:$true] %s225
        %228 = dma.hbm_to_vmem [thread:$0]  %s224, 16, %s226, %s215
        %s229 = sadd.s32 %s143, 4
        %s230 = sld [smem:[#allocation5 + %s229]]
        %p231 = scmp.gt.s32.totalorder %s230, 0
        %s232 = scalar_select %p231, %s230, 0
        %p233 = scmp.lt.s32.totalorder %s232, 63
        %s234 = scalar_select %p233, %s232, 63
        %s235 = scalar_lea.hbm %s1, %s234
        %s236 = scalar_lea.vmem [#allocation2], 4
        %s237 = scalar_lea.sflag [#allocation3], 4
        // Predicated region
        $region45: #{tpu_custom_call.1} parent=23 // pred_check
          _
        $region46: #{tpu_custom_call.1} parent=23 // pred_check_branch
          %239 = sbr.rel target = $region48
        $region47: #{tpu_custom_call.1} parent=23 // pred_region
          %240 = sst [smem:[#allocation12]] [#allocation21]
          %241 = sst [smem:[#allocation13]] [#allocation20]
        $region48: #{tpu_custom_call.1} parent=23 // pred_fallthru
          _
        %243 = shalt.err (0)
        %s245 = sshll.u32 %s235, 4
        %s246 = int_to_ptr.hbm [resolvable:$true] %s245
        %s247 = sshll.u32 %s236, 4
        %s248 = int_to_ptr.vmem [resolvable:$true] %s247
        %250 = dma.hbm_to_vmem [thread:$0]  %s246, 16, %s248, %s237
        %s251 = sadd.s32 %s143, 5
        %s252 = sld [smem:[#allocation5 + %s251]]
        %p253 = scmp.gt.s32.totalorder %s252, 0
        %s254 = scalar_select %p253, %s252, 0
        %p255 = scmp.lt.s32.totalorder %s254, 63
        %s256 = scalar_select %p255, %s254, 63
        %s257 = scalar_lea.hbm %s1, %s256
        %s258 = scalar_lea.vmem [#allocation2], 5
        %s259 = scalar_lea.sflag [#allocation3], 5
        // Predicated region
        $region49: #{tpu_custom_call.1} parent=23 // pred_check
          _
        $region50: #{tpu_custom_call.1} parent=23 // pred_check_branch
          %261 = sbr.rel target = $region52
        $region51: #{tpu_custom_call.1} parent=23 // pred_region
          %262 = sst [smem:[#allocation12]] [#allocation23]
          %263 = sst [smem:[#allocation13]] [#allocation22]
        $region52: #{tpu_custom_call.1} parent=23 // pred_fallthru
          _
        %265 = shalt.err (0)
        %s267 = sshll.u32 %s257, 4
        %s268 = int_to_ptr.hbm [resolvable:$true] %s267
        %s269 = sshll.u32 %s258, 4
        %s270 = int_to_ptr.vmem [resolvable:$true] %s269
        %272 = dma.hbm_to_vmem [thread:$0]  %s268, 16, %s270, %s259
        %s273 = sadd.s32 %s143, 6
        %s274 = sld [smem:[#allocation5 + %s273]]
        %p275 = scmp.gt.s32.totalorder %s274, 0
        %s276 = scalar_select %p275, %s274, 0
        %p277 = scmp.lt.s32.totalorder %s276, 63
        %s278 = scalar_select %p277, %s276, 63
        %s279 = scalar_lea.hbm %s1, %s278
        %s280 = scalar_lea.vmem [#allocation2], 6
        %s281 = scalar_lea.sflag [#allocation3], 6
        // Predicated region
        $region53: #{tpu_custom_call.1} parent=23 // pred_check
          _
        $region54: #{tpu_custom_call.1} parent=23 // pred_check_branch
          %283 = sbr.rel target = $region56
        $region55: #{tpu_custom_call.1} parent=23 // pred_region
          %284 = sst [smem:[#allocation12]] [#allocation25]
          %285 = sst [smem:[#allocation13]] [#allocation24]
        $region56: #{tpu_custom_call.1} parent=23 // pred_fallthru
          _
        %287 = shalt.err (0)
        %s289 = sshll.u32 %s279, 4
        %s290 = int_to_ptr.hbm [resolvable:$true] %s289
        %s291 = sshll.u32 %s280, 4
        %s292 = int_to_ptr.vmem [resolvable:$true] %s291
        %294 = dma.hbm_to_vmem [thread:$0]  %s290, 16, %s292, %s281
        %s295 = sadd.s32 %s143, 7
        %s296 = sld [smem:[#allocation5 + %s295]]
        %p297 = scmp.gt.s32.totalorder %s296, 0
        %s298 = scalar_select %p297, %s296, 0
        %p299 = scmp.lt.s32.totalorder %s298, 63
        %s300 = scalar_select %p299, %s298, 63
        %s301 = scalar_lea.hbm %s1, %s300
        %s302 = scalar_lea.vmem [#allocation2], 7
        %s303 = scalar_lea.sflag [#allocation3], 7
        // Predicated region
        $region57: #{tpu_custom_call.1} parent=23 // pred_check
          _
        $region58: #{tpu_custom_call.1} parent=23 // pred_check_branch
          %305 = sbr.rel target = $region60
        $region59: #{tpu_custom_call.1} parent=23 // pred_region
          %306 = sst [smem:[#allocation12]] [#allocation27]
          %307 = sst [smem:[#allocation13]] [#allocation26]
        $region60: #{tpu_custom_call.1} parent=23 // pred_fallthru
          _
        %309 = shalt.err (0)
        %s311 = sshll.u32 %s301, 4
        %s312 = int_to_ptr.hbm [resolvable:$true] %s311
        %s313 = sshll.u32 %s302, 4
        %s314 = int_to_ptr.vmem [resolvable:$true] %s313
        %316 = dma.hbm_to_vmem [thread:$0]  %s312, 16, %s314, %s303
        loop: start=0, step=1, limit=8
        $region61: #{tpu_custom_call.1} parent=23 // loop_pre_header
          _
        $region62: #{tpu_custom_call.1} parent=23 // loop_header
          %s318 = sphi 0, %s322
          %p319 = scmp.ge.s32.totalorder %s318, 8
        $region63: #{tpu_custom_call.1} parent=23 // loop_header_branch
          %321 = sbr.rel (%p319) target = $region67
        $region64: #{tpu_custom_call.1} parent=23 // loop_body
          %p323 = scmp.lt.s32.totalorder %s318, 0
          %s324 = ssub.s32 0, %s318
          %s325 = scalar_select %p323, %s324, %s318
          %s326 = sand.u32 %s325, 7
          %s327 = ssub.s32 0, %s326
          %s328 = scalar_select %p323, %s327, %s326
          %p329 = scmp.ne.s32.totalorder %s328, 0
          %p330 = scmp.lt.s32.totalorder %s328, 0
          %p331 = pnand %p330, %p329
          %p332 = pneg %p331
          %s333 = sadd.s32 %s328, 8
          %s334 = scalar_select %p332, %s333, %s328
          %s335 = scalar_lea.sflag [#allocation3], %s334
          %s336 = smul.u32 1, 1
          %s337 = sshll.u32 %s336, 4
          %338 = dma.done %s335, %s337
          %s339 = sadd.s32 %s318, 8
          %p340 = scmp.lt.s32.totalorder %s339, 8
          // Predicated region
          $region68: #{tpu_custom_call.1} parent=64 // pred_check
            %p341 = pneg %p340
          $region69: #{tpu_custom_call.1} parent=64 // pred_check_branch
            %343 = sbr.rel (%p341) target = $region71
          $region70: #{tpu_custom_call.1} parent=64 // pred_region
            %s344 = sadd.s32 %s143, %s339
            %s345 = sld [smem:[#allocation5 + %s344]]
            %p346 = scmp.gt.s32.totalorder %s345, 0
            %s347 = scalar_select %p346, %s345, 0
            %p348 = scmp.lt.s32.totalorder %s347, 63
            %s349 = scalar_select %p348, %s347, 63
            %p350 = scmp.lt.s32.totalorder %s339, 0
            %s351 = ssub.s32 0, %s339
            %s352 = scalar_select %p350, %s351, %s339
            %s353 = sand.u32 %s352, 7
            %s354 = ssub.s32 0, %s353
            %s355 = scalar_select %p350, %s354, %s353
            %p356 = scmp.ne.s32.totalorder %s355, 0
            %p357 = scmp.lt.s32.totalorder %s355, 0
            %p358 = pnand %p357, %p356
            %p359 = pneg %p358
            %s360 = sadd.s32 %s355, 8
            %s361 = scalar_select %p359, %s360, %s355
            %s362 = scalar_lea.hbm %s1, %s349
            %s363 = scalar_lea.vmem [#allocation2], %s339
            %s364 = scalar_lea.sflag [#allocation3], %s361
            // Predicated region
            $region72: #{tpu_custom_call.1} parent=70 // pred_check
              _
            $region73: #{tpu_custom_call.1} parent=70 // pred_check_branch
              %366 = sbr.rel target = $region75
            $region74: #{tpu_custom_call.1} parent=70 // pred_region
              %367 = sst [smem:[#allocation12]] [#allocation29]
              %368 = sst [smem:[#allocation13]] [#allocation28]
            $region75: #{tpu_custom_call.1} parent=70 // pred_fallthru
              _
            %370 = shalt.err (0)
            %s372 = sshll.u32 %s362, 4
            %s373 = int_to_ptr.hbm [resolvable:$true] %s372
            %s374 = sshll.u32 %s363, 4
            %s375 = int_to_ptr.vmem [resolvable:$true] %s374
            %377 = dma.hbm_to_vmem [thread:$0]  %s373, 16, %s375, %s364
          $region71: #{tpu_custom_call.1} parent=64 // pred_fallthru
            _
        $region65: #{tpu_custom_call.1} parent=23 // loop_footer
          %s322 = sadd.s32 1, %s318
        $region66: #{tpu_custom_call.1} parent=23 // loop_footer_branch
          %317 = sbr.rel target = $region62
        $region67: #{tpu_custom_call.1} parent=23 // loop_exit
          _
        %v378 = vld [vmem:[#allocation2] sm:$0xff]
        %v379 = vld [vmem:[#allocation6] sm:$0xff]
        %v380 = vadd.f32 %v378, %v379
        %381 = vst [vmem:[%s140] sm:$0xff] %v380
        %s382 = sand.u32 %s74, 1
        %s383 = scalar_lea.sflag [#allocation8], %s382
        %s384 = sand.u32 %s74, 1
        %s385 = smul.addr %s384, 8
        %s386 = scalar_lea.vmem [#allocation9], %s385
        // Predicated region
        $region76: #{tpu_custom_call.1} parent=23 // pred_check
          %p387 = pneg %p84
        $region77: #{tpu_custom_call.1} parent=23 // pred_check_branch
          %389 = sbr.rel (%p387) target = $region79
        $region78: #{tpu_custom_call.1} parent=23 // pred_region
          %391 = vsyncadd %s383, 0
          %s392 = sadd.s32 %s30, %s31
          %s393 = smul.addr %s392, 8
          %s394 = scalar_lea.hbm %s3, %s393
          %s396 = sshll.u32 %s386, 4
          %s397 = int_to_ptr.vmem [resolvable:$true] %s396
          %s398 = sshll.u32 %s394, 4
          %s399 = int_to_ptr.hbm [resolvable:$true] %s398
          %401 = dma.vmem_to_hbm [thread:$0]  %s397, 128, %s399, %s383
        $region79: #{tpu_custom_call.1} parent=23 // pred_fallthru
          _
      $region24: #{tpu_custom_call.1} parent=5 // pred_fallthru
        _
      %p402 = scmp.le.s32.totalorder 2, %s21
      // Predicated region
      $region80: #{tpu_custom_call.1} parent=5 // pred_check
        %p403 = pneg %p402
      $region81: #{tpu_custom_call.1} parent=5 // pred_check_branch
        %405 = sbr.rel (%p403) target = $region83
      $region82: #{tpu_custom_call.1} parent=5 // pred_region
        %s406 = ssub.s32 %s21, 2
        // Predicated region
        $region84: #{tpu_custom_call.1} parent=82 // pred_check
          %p407 = pneg %p90
        $region85: #{tpu_custom_call.1} parent=82 // pred_check_branch
          %409 = sbr.rel (%p407) target = $region87
        $region86: #{tpu_custom_call.1} parent=82 // pred_region
          %s410 = sand.u32 %s75, 1
          %s411 = scalar_lea.sflag [#allocation8], %s410
          %s412 = sand.u32 %s75, 1
          %s413 = smul.addr %s412, 8
          %s414 = scalar_lea.vmem [#allocation9], %s413
          %416 = dma.done %s411, 128
        $region87: #{tpu_custom_call.1} parent=82 // pred_fallthru
          _
      $region83: #{tpu_custom_call.1} parent=5 // pred_fallthru
        _
    $region6: #{tpu_custom_call.1} parent=1 // loop_footer
      %s25 = sadd.s32 1, %s21
    $region7: #{tpu_custom_call.1} parent=1 // loop_footer_branch
      %20 = sbr.rel target = $region3
    $region8: #{tpu_custom_call.1} parent=1 // loop_exit
      _
    %417 = vsyncpa [#allocation7], 1
    %s418 = scalar_lea.sflag [#allocation7], 1
    %419 = vsyncpa %s418, 1
    %420 = vsyncpa [#allocation8], 1
    %s421 = scalar_lea.sflag [#allocation8], 1
    %422 = vsyncpa %s421, 1
  %423 = vsyncmov [#allocation3]
  %s424 = vpop.sfrf %423
  %p425 = scmp.eq.s32.totalorder %s424, 0
  %p426 = pneg %p425
  %428 = shalt.err (%p426)
  %s429 = scalar_lea.sflag [#allocation3], 1
  %430 = vsyncmov %s429
  %s431 = vpop.sfrf %430
  %p432 = scmp.eq.s32.totalorder %s431, 0
  %p433 = pneg %p432
  %435 = shalt.err (%p433)
  %s436 = scalar_lea.sflag [#allocation3], 2
  %437 = vsyncmov %s436
  %s438 = vpop.sfrf %437
  %p439 = scmp.eq.s32.totalorder %s438, 0
  %p440 = pneg %p439
  %442 = shalt.err (%p440)
  %s443 = scalar_lea.sflag [#allocation3], 3
  %444 = vsyncmov %s443
  %s445 = vpop.sfrf %444
  %p446 = scmp.eq.s32.totalorder %s445, 0
  %p447 = pneg %p446
  %449 = shalt.err (%p447)
  %s450 = scalar_lea.sflag [#allocation3], 4
  %451 = vsyncmov %s450
  %s452 = vpop.sfrf %451
  %p453 = scmp.eq.s32.totalorder %s452, 0
  %p454 = pneg %p453
  %456 = shalt.err (%p454)
  %s457 = scalar_lea.sflag [#allocation3], 5
  %458 = vsyncmov %s457
  %s459 = vpop.sfrf %458
  %p460 = scmp.eq.s32.totalorder %s459, 0
  %p461 = pneg %p460
  %463 = shalt.err (%p461)
  %s464 = scalar_lea.sflag [#allocation3], 6
  %465 = vsyncmov %s464
  %s466 = vpop.sfrf %465
  %p467 = scmp.eq.s32.totalorder %s466, 0
  %p468 = pneg %p467
  %470 = shalt.err (%p468)
  %s471 = scalar_lea.sflag [#allocation3], 7
  %472 = vsyncmov %s471
  %s473 = vpop.sfrf %472
  %p474 = scmp.eq.s32.totalorder %s473, 0
  %p475 = pneg %p474
  %477 = shalt.err (%p475)

</llo_original>
